<compile_context>
chip_gen: v6e
topology: v6e:2x2x1
jax: 0.10.0
libtpu: 0.0.40
codegen_flags: <defaults>
</compile_context>

<pallas_src>
import functools

import jax
import jax.numpy as jnp
from jax.experimental import pallas as pl
from jax.experimental.pallas import tpu as pltpu  # noqa: F401

HIDSIZE = 32       # hidsize
TIMESTEPS = 8      # timesteps per chunk
HEADS = 8          # attention_heads
MEMSIZE = 16       # attention_memory_size (small synthetic value)
BATCH = 2
PW_RATIO = 4       # pointwise_ratio
LN_EPS = 1e-5
NEG_BIAS = -1e30   # f32-safe "minus infinity" for masked logits


# --------------------------------------------------------------------------
# Kernel: the whole forward pass for the whole batch, single invocation.
# --------------------------------------------------------------------------
def _resblock_kernel(x_ref, qb_ref, kpos_ref, kmem_ref, vmem_ref,
                     w_qkvo_ref, b_qkv_ref, w0_ref, w1_ref, vecs_ref,
                     y_ref, kout_ref, vout_ref,
                     *, B, T, H, M, heads):
    BT = B * T
    dh = H // heads
    f32 = jnp.float32

    vecs = vecs_ref[...]                       # (6+heads, H): LN/bias + head masks
    g_r, b_r = vecs[0:1, :], vecs[1:2, :]
    g0, b0 = vecs[2:3, :], vecs[3:4, :]
    bo, b1 = vecs[4:5, :], vecs[5:6, :]
    hm = vecs[6:6 + heads, :]                  # (heads, H) 0/1 per-head feature mask

    def layer_norm(v, g, b):
        mu = jnp.mean(v, axis=-1, keepdims=True)
        var = jnp.mean((v - mu) ** 2, axis=-1, keepdims=True)
        return (v - mu) * jax.lax.rsqrt(var + LN_EPS) * g + b

    x = x_ref[...]                             # (B*T, H)  batch folded into rows

    # ---------------- pre_r_ln ----------------
    xln = layer_norm(x, g_r, b_r)

    # ------------- fused QKV (+O) projection: one MXU push -------------
    w_all = w_qkvo_ref[...]                    # (H, 4H) = [Wq | Wk | Wv | Wo]
    z = jnp.dot(xln, w_all, preferred_element_type=f32) + b_qkv_ref[...]
    q = z[:, 0:H] * (1.0 / dh)                 # muP: 1/d_head logit scale
    k = z[:, H:2 * H]
    v = z[:, 2 * H:3 * H]

    # keys / values seen by attention: [memory ; current chunk], un-expanded
    kmem = kmem_ref[...]                       # (B*M, H)
    vmem = vmem_ref[...]
    k_all = jnp.concatenate([kmem, k], axis=0)     # (S_all, H), S_all = B*(M+T)
    v_all = jnp.concatenate([vmem, v], axis=0)

    # ---- block-diagonal attention with Q masked per head (K/V stay small) ----
    # Expanded query rows are ordered (head, batch, step); zeroing Q outside
    # head h's dh features makes the H-contraction equal the per-head dh
    # contraction, so logits are only (heads*BT, S_all).
    q_exp = jnp.concatenate([q * hm[h:h + 1, :] for h in range(heads)],
                            axis=0)                            # (heads*BT, H)
    logits = jax.lax.dot_general(q_exp, k_all, (((1,), (1,)), ((), ())),
                                 preferred_element_type=f32)   # (heads*BT, S_all)

    # causal / reset / batch-block / memory-validity mask, built in-kernel
    # from tiny int32 metadata (global positions with batch stride > M+T).
    qb = qb_ref[...]                                           # (BT, 2) int32
    qb_exp = jnp.concatenate([qb] * heads, axis=0)             # (heads*BT, 2)
    q_hi = qb_exp[:, 0:1]                                      # query global pos
    q_lo = qb_exp[:, 1:2]                                      # reset lower bound
    kpos = kpos_ref[...]                                       # (1, S_all) int32
    allowed = (kpos <= q_hi) & (kpos >= q_lo)                  # (heads*BT, S_all)
    logits = jnp.where(allowed, logits, NEG_BIAS)

    m = jnp.max(logits, axis=-1, keepdims=True)
    p = jnp.exp(logits - m)
    denom = jnp.sum(p, axis=-1, keepdims=True)
    ctx = jnp.dot(p, v_all, preferred_element_type=f32)        # (heads*BT, H)
    ctx = ctx * pl.reciprocal(denom, approx=True)

    # Recombine heads: keep each head's dh feature slice (same masks as for Q)
    # and sum the row blocks - plain vreg muls/adds, no relayout.
    attn = ctx[0:BT, :] * hm[0:1, :]
    for h in range(1, heads):
        attn = attn + ctx[h * BT:(h + 1) * BT, :] * hm[h:h + 1, :]

    wo = w_all[:, 3 * H:4 * H]
    attn = jnp.dot(attn, wo, preferred_element_type=f32) + bo
    residual = attn

    # ------------- pointwise MLP -------------
    h0 = layer_norm(attn, g0, b0)
    h0 = jnp.maximum(jnp.dot(h0, w0_ref[...], preferred_element_type=f32), 0.0)
    out = jnp.dot(h0, w1_ref[...], preferred_element_type=f32) + b1

    # TODO(synk): Dropout(p=0.2) is identity (eval mode).
    y_ref[...] = out + residual

    # ------------- recurrent state writeback (direct stores) -------------
    # new memory = last M of [old memory ; new projected K/V], per batch.
    for b in range(B):
        if M > T:
            kout_ref[b * M:b * M + (M - T), :] = kmem[b * M + T:(b + 1) * M, :]
            vout_ref[b * M:b * M + (M - T), :] = vmem[b * M + T:(b + 1) * M, :]
        kout_ref[b * M + (M - T):(b + 1) * M, :] = k[b * T:(b + 1) * T, :]
        vout_ref[b * M + (M - T):(b + 1) * M, :] = v[b * T:(b + 1) * T, :]


# --------------------------------------------------------------------------
# Host-side helpers (plain XLA, outside the kernel).
# --------------------------------------------------------------------------
def _build_mask_metadata(first, B, T, M):
    """Tiny int32 metadata replacing the old pre-expanded f32 masks.

    Each batch gets a disjoint band of global positions (stride LARGE > M+T),
    so `batch match AND causal AND not-before-reset AND memory-valid` collapses
    to two scalar compares:  q_lo <= k_gpos <= q_hi.
    """
    LARGE = M + T + 1
    idx = jnp.arange(T, dtype=jnp.int32)
    reset_pos = jnp.where(first > 0.5, idx[None, :], jnp.int32(-(M + 1)))
    last_reset = jax.lax.cummax(reset_pos, axis=1)               # (B, T)

    boff = jnp.arange(B, dtype=jnp.int32)[:, None] * LARGE       # (B, 1)
    q_hi = (boff + idx[None, :]).reshape(B * T, 1)               # query global pos
    q_lo = (boff + last_reset).reshape(B * T, 1)                 # allowed lower bound
    qbounds = jnp.concatenate([q_hi, q_lo], axis=1)              # (BT, 2) int32

    mem_pos = jnp.arange(-M, 0, dtype=jnp.int32)                 # memory positions
    k_mem_gpos = (boff + mem_pos[None, :]).reshape(1, B * M)
    k_cur_gpos = (boff + idx[None, :]).reshape(1, B * T)
    kgpos = jnp.concatenate([k_mem_gpos, k_cur_gpos], axis=1)    # (1, S_all) int32
    return qbounds, kgpos


@jax.jit
def residual_recurrent_block(x, first, state, packed_params):
    """x: (B,T,H) f32, first: (B,T) {0,1}, state: (k_mem, v_mem) each (B,M,H)."""
    B, T, H = x.shape
    k_mem, v_mem = state
    M = k_mem.shape[1]
    heads = HEADS
    assert M >= T and H % heads == 0

    w_qkvo, b_qkv, w0, w1, vecs = packed_params
    qbounds, kgpos = _build_mask_metadata(first, B, T, M)

    # wrapper-side reshapes are free; the kernel works on 2-D (rows, H) slabs
    x2 = x.reshape(B * T, H)
    km2 = k_mem.reshape(B * M, H)
    vm2 = v_mem.reshape(B * M, H)

    kernel = functools.partial(_resblock_kernel, B=B, T=T, H=H, M=M, heads=heads)
    y2, ko2, vo2 = pl.pallas_call(
        kernel,
        out_shape=(jax.ShapeDtypeStruct((B * T, H), jnp.float32),
                   jax.ShapeDtypeStruct((B * M, H), jnp.float32),
                   jax.ShapeDtypeStruct((B * M, H), jnp.float32)),
        # kmem -> k_out, vmem -> v_out: reuse the state HBM buffers in place.
        input_output_aliases={3: 1, 4: 2},
    )(x2, qbounds, kgpos, km2, vm2, w_qkvo, b_qkv, w0, w1, vecs)

    return y2.reshape(B, T, H), (ko2.reshape(B, M, H), vo2.reshape(B, M, H))


# --------------------------------------------------------------------------
# Parameters (same init as before) + host-side packing (done once).
# --------------------------------------------------------------------------
def init_params(key, H=HIDSIZE, ratio=PW_RATIO):
    """Deterministic synthetic parameter init mirroring the module __init__."""
    ks = jax.random.split(key, 6)
    s = 2.0 ** (-0.5)   # init_scale * 2**-0.5 (init_scale=1)

    def row_normalize(w, scale):  # w in PyTorch (out, in) layout
        norm = jnp.sqrt(jnp.sum(w * w, axis=1, keepdims=True))
        return w * (scale / norm)

    g_r = jnp.ones((1, H), jnp.float32)
    b_r = jnp.zeros((1, H), jnp.float32)

    # TODO(synk): MaskedAttention source not provided - QKV/out-proj use a
    # fan-in normal init; out-proj scaled by s like the other s-scaled layers.
    wq = jax.random.normal(ks[0], (H, H), jnp.float32) / jnp.sqrt(H)
    wk = jax.random.normal(ks[1], (H, H), jnp.float32) / jnp.sqrt(H)
    wv = jax.random.normal(ks[2], (H, H), jnp.float32) / jnp.sqrt(H)
    wo = (jax.random.normal(ks[3], (H, H), jnp.float32) / jnp.sqrt(H)) * s
    bq = jnp.zeros((1, H), jnp.float32)
    bk = jnp.zeros((1, H), jnp.float32)
    bv = jnp.zeros((1, H), jnp.float32)
    bo = jnp.zeros((1, H), jnp.float32)

    g0 = jnp.ones((1, H), jnp.float32)
    b0 = jnp.zeros((1, H), jnp.float32)
    w0_t = row_normalize(jax.random.normal(ks[4], (ratio * H, H), jnp.float32), 1.0)
    w0 = w0_t.T                                  # (H, 4H) for x @ W

    w1_t = row_normalize(jax.random.normal(ks[5], (H, ratio * H), jnp.float32), s)
    w1 = w1_t.T                                  # (4H, H)
    b1 = jnp.zeros((1, H), jnp.float32)

    return (g_r, b_r, wq, bq, wk, bk, wv, bv, wo, bo, g0, b0, w0, w1, b1)


def pack_params(params, heads=HEADS):
    """Fuse the tiny parameter tensors into 5 packed arrays (done once).

    `vecs` also carries the static per-head feature masks (heads, H) used to
    mask Q per head and to recombine head outputs inside the kernel.
    """
    (g_r, b_r, wq, bq, wk, bk, wv, bv, wo, bo, g0, b0, w0, w1, b1) = params
    H = g_r.shape[1]
    dh = H // heads
    w_qkvo = jnp.concatenate([wq, wk, wv, wo], axis=1)                 # (H, 4H)
    b_qkv = jnp.concatenate([bq, bk, bv, jnp.zeros_like(bo)], axis=1)  # (1, 4H)
    col_head = jnp.arange(H, dtype=jnp.int32) // dh
    hmask = (col_head[None, :] ==
             jnp.arange(heads, dtype=jnp.int32)[:, None]).astype(jnp.float32)
    vecs = jnp.concatenate([g_r, b_r, g0, b0, bo, b1, hmask], axis=0)  # (6+heads, H)
    return (w_qkvo, b_qkv, w0, w1, vecs)


# --------------------------------------------------------------------------
# Pure-JAX reference (independent per-batch / per-head formulation).
# --------------------------------------------------------------------------
def _reference_forward(x, first, state, params):
    (g_r, b_r, wq, bq, wk, bk, wv, bv, wo, bo, g0, b0, w0, w1, b1) = params
    k_mem, v_mem = state
    B, T, H = x.shape
    M = k_mem.shape[1]
    heads, dh = HEADS, H // HEADS

    def ln(v, g, b):
        mu = v.mean(-1, keepdims=True)
        var = ((v - mu) ** 2).mean(-1, keepdims=True)
        return (v - mu) / jnp.sqrt(var + LN_EPS) * g + b

    ys, kos, vos = [], [], []
    for b in range(B):
        xb = ln(x[b], g_r, b_r)
        q = xb @ wq + bq
        k = xb @ wk + bk
        v = xb @ wv + bv
        k_all = jnp.concatenate([k_mem[b], k], axis=0)
        v_all = jnp.concatenate([v_mem[b], v], axis=0)

        idx = jnp.arange(T)
        reset = jnp.where(first[b] > 0.5, idx, -(M + 1))
        last_reset = jax.lax.cummax(reset, axis=0)
        kpos = jnp.concatenate([jnp.arange(-M, 0), jnp.arange(T)])
        allowed = ((kpos[None, :] <= idx[:, None]) &
                   (kpos[None, :] >= last_reset[:, None]))

        outs = []
        for h in range(heads):
            sl = slice(h * dh, (h + 1) * dh)
            lg = (q[:, sl] @ k_all[:, sl].T) / dh
            lg = jnp.where(allowed, lg, NEG_BIAS)
            pr = jax.nn.softmax(lg, axis=-1)
            outs.append(pr @ v_all[:, sl])
        attn = jnp.concatenate(outs, axis=-1) @ wo + bo
        resid = attn
        hh = jnp.maximum(ln(attn, g0, b0) @ w0, 0.0)
        ys.append(hh @ w1 + b1 + resid)
        kos.append(k_all[T:])
        vos.append(v_all[T:])
    return jnp.stack(ys), (jnp.stack(kos), jnp.stack(vos))


if __name__ == "__main__":
    key = jax.random.PRNGKey(0)
    kx, kkm, kvm, kp = jax.random.split(key, 4)

    x = jax.random.normal(kx, (BATCH, TIMESTEPS, HIDSIZE), jnp.float32)
    # batch 0: no resets (memory attended); batch 1: episode reset at t=3
    first = jnp.zeros((BATCH, TIMESTEPS), jnp.float32).at[1, 3].set(1.0)
    k_mem = jax.random.normal(kkm, (BATCH, MEMSIZE, HIDSIZE), jnp.float32) * 0.1
    v_mem = jax.random.normal(kvm, (BATCH, MEMSIZE, HIDSIZE), jnp.float32) * 0.1

    params = init_params(kp)
    packed = pack_params(params)

    y, (k_out, v_out) = residual_recurrent_block(x, first, (k_mem, v_mem), packed)
    jax.block_until_ready((y, k_out, v_out))

    assert y.shape == (BATCH, TIMESTEPS, HIDSIZE) and y.dtype == jnp.float32
    assert k_out.shape == (BATCH, MEMSIZE, HIDSIZE)
    assert v_out.shape == (BATCH, MEMSIZE, HIDSIZE)
    assert bool(jnp.all(jnp.isfinite(y)))

    # numerical check against the plain-JAX reference
    y_ref, (k_ref, v_ref) = _reference_forward(x, first, (k_mem, v_mem), params)
    assert bool(jnp.allclose(y, y_ref, atol=1e-2, rtol=1e-2))
    assert bool(jnp.allclose(k_out, k_ref, atol=1e-2, rtol=1e-2))
    assert bool(jnp.allclose(v_out, v_ref, atol=1e-2, rtol=1e-2))

    print("KERNEL_OK")
</pallas_src>

<mosaic_0001>
module attributes {stable_mosaic.version = 11 : i64} {
  func.func @_resblock_kernel(%arg0: memref<16x32xf32, #tpu.memory_space<vmem>>, %arg1: memref<16x2xi32, #tpu.memory_space<vmem>>, %arg2: memref<1x48xi32, #tpu.memory_space<vmem>>, %arg3: memref<32x32xf32, #tpu.memory_space<vmem>>, %arg4: memref<32x32xf32, #tpu.memory_space<vmem>>, %arg5: memref<32x128xf32, #tpu.memory_space<vmem>>, %arg6: memref<1x128xf32, #tpu.memory_space<vmem>>, %arg7: memref<32x128xf32, #tpu.memory_space<vmem>>, %arg8: memref<128x32xf32, #tpu.memory_space<vmem>>, %arg9: memref<14x32xf32, #tpu.memory_space<vmem>>, %arg10: memref<16x32xf32, #tpu.memory_space<vmem>>, %arg11: memref<32x32xf32, #tpu.memory_space<vmem>>, %arg12: memref<32x32xf32, #tpu.memory_space<vmem>>) attributes {dimension_semantics = [], scalar_prefetch = 0 : i64, scratch_operands = 0 : i64, tpu.core_type = #tpu.core_type<tc>} {
    %c0 = arith.constant 0 : index
    %c0_0 = arith.constant 0 : index
    %0 = vector.load %arg9[%c0, %c0_0] : memref<14x32xf32, #tpu.memory_space<vmem>>, vector<14x32xf32>
    %1 = vector.extract_strided_slice %0 {offsets = [0, 0], sizes = [1, 32], strides = [1, 1]} : vector<14x32xf32> to vector<1x32xf32>
    %2 = vector.extract_strided_slice %0 {offsets = [1, 0], sizes = [1, 32], strides = [1, 1]} : vector<14x32xf32> to vector<1x32xf32>
    %3 = vector.extract_strided_slice %0 {offsets = [2, 0], sizes = [1, 32], strides = [1, 1]} : vector<14x32xf32> to vector<1x32xf32>
    %4 = vector.extract_strided_slice %0 {offsets = [3, 0], sizes = [1, 32], strides = [1, 1]} : vector<14x32xf32> to vector<1x32xf32>
    %5 = vector.extract_strided_slice %0 {offsets = [4, 0], sizes = [1, 32], strides = [1, 1]} : vector<14x32xf32> to vector<1x32xf32>
    %6 = vector.extract_strided_slice %0 {offsets = [5, 0], sizes = [1, 32], strides = [1, 1]} : vector<14x32xf32> to vector<1x32xf32>
    %7 = vector.extract_strided_slice %0 {offsets = [6, 0], sizes = [8, 32], strides = [1, 1]} : vector<14x32xf32> to vector<8x32xf32>
    %c0_1 = arith.constant 0 : index
    %c0_2 = arith.constant 0 : index
    %8 = vector.load %arg0[%c0_1, %c0_2] : memref<16x32xf32, #tpu.memory_space<vmem>>, vector<16x32xf32>
    %cst = arith.constant dense<0.000000e+00> : vector<16xf32>
    %9 = vector.multi_reduction <add>, %8, %cst [1] : vector<16x32xf32> to vector<16xf32>
    %10 = vector.shape_cast %9 : vector<16xf32> to vector<16x1xf32>
    %cst_3 = arith.constant 3.200000e+01 : f32
    %11 = vector.broadcast %cst_3 : f32 to vector<16x1xf32>
    %12 = arith.divf %10, %11 : vector<16x1xf32>
    %13 = vector.broadcast %12 : vector<16x1xf32> to vector<16x32xf32>
    %14 = arith.subf %8, %13 : vector<16x32xf32>
    %15 = arith.mulf %14, %14 : vector<16x32xf32>
    %cst_4 = arith.constant dense<0.000000e+00> : vector<16xf32>
    %16 = vector.multi_reduction <add>, %15, %cst_4 [1] : vector<16x32xf32> to vector<16xf32>
    %17 = vector.shape_cast %16 : vector<16xf32> to vector<16x1xf32>
    %cst_5 = arith.constant 3.200000e+01 : f32
    %18 = vector.broadcast %cst_5 : f32 to vector<16x1xf32>
    %19 = arith.divf %17, %18 : vector<16x1xf32>
    %20 = vector.broadcast %12 : vector<16x1xf32> to vector<16x32xf32>
    %21 = arith.subf %8, %20 : vector<16x32xf32>
    %cst_6 = arith.constant 9.99999974E-6 : f32
    %22 = vector.broadcast %cst_6 : f32 to vector<16x1xf32>
    %23 = arith.addf %19, %22 : vector<16x1xf32>
    %24 = math.rsqrt %23 : vector<16x1xf32>
    %25 = vector.broadcast %24 : vector<16x1xf32> to vector<16x32xf32>
    %26 = arith.mulf %21, %25 : vector<16x32xf32>
    %27 = vector.broadcast %1 : vector<1x32xf32> to vector<16x32xf32>
    %28 = arith.mulf %26, %27 : vector<16x32xf32>
    %29 = vector.broadcast %2 : vector<1x32xf32> to vector<16x32xf32>
    %30 = arith.addf %28, %29 : vector<16x32xf32>
    %c0_7 = arith.constant 0 : index
    %c0_8 = arith.constant 0 : index
    %31 = vector.load %arg5[%c0_7, %c0_8] : memref<32x128xf32, #tpu.memory_space<vmem>>, vector<32x128xf32>
    %cst_9 = arith.constant dense<0.000000e+00> : vector<16x128xf32>
    %32 = tpu.matmul %30, %31, %cst_9 {dimension_numbers = #tpu.dot_dimension_numbers<[1], [0], [0], [1], [0, 0, 1, 1], [], []>} : vector<16x32xf32>, vector<32x128xf32>, vector<16x128xf32> -> vector<16x128xf32>
    %c0_10 = arith.constant 0 : index
    %c0_11 = arith.constant 0 : index
    %33 = vector.load %arg6[%c0_10, %c0_11] : memref<1x128xf32, #tpu.memory_space<vmem>>, vector<1x128xf32>
    %34 = vector.broadcast %33 : vector<1x128xf32> to vector<16x128xf32>
    %35 = arith.addf %32, %34 : vector<16x128xf32>
    %36 = vector.extract_strided_slice %35 {offsets = [0, 0], sizes = [16, 32], strides = [1, 1]} : vector<16x128xf32> to vector<16x32xf32>
    %cst_12 = arith.constant 2.500000e-01 : f32
    %37 = vector.broadcast %cst_12 : f32 to vector<16x32xf32>
    %38 = arith.mulf %36, %37 : vector<16x32xf32>
    %39 = vector.extract_strided_slice %35 {offsets = [0, 32], sizes = [16, 32], strides = [1, 1]} : vector<16x128xf32> to vector<16x32xf32>
    %40 = vector.extract_strided_slice %35 {offsets = [0, 64], sizes = [16, 32], strides = [1, 1]} : vector<16x128xf32> to vector<16x32xf32>
    %c0_13 = arith.constant 0 : index
    %c0_14 = arith.constant 0 : index
    %41 = vector.load %arg3[%c0_13, %c0_14] : memref<32x32xf32, #tpu.memory_space<vmem>>, vector<32x32xf32>
    %c0_15 = arith.constant 0 : index
    %c0_16 = arith.constant 0 : index
    %42 = vector.load %arg4[%c0_15, %c0_16] : memref<32x32xf32, #tpu.memory_space<vmem>>, vector<32x32xf32>
    %43 = tpu.concatenate %41, %39 in 0 : vector<32x32xf32>, vector<16x32xf32> -> vector<48x32xf32>
    %44 = tpu.concatenate %42, %40 in 0 : vector<32x32xf32>, vector<16x32xf32> -> vector<48x32xf32>
    %45 = vector.extract_strided_slice %7 {offsets = [0, 0], sizes = [1, 32], strides = [1, 1]} : vector<8x32xf32> to vector<1x32xf32>
    %46 = vector.broadcast %45 : vector<1x32xf32> to vector<16x32xf32>
    %47 = arith.mulf %38, %46 : vector<16x32xf32>
    %48 = vector.extract_strided_slice %7 {offsets = [1, 0], sizes = [1, 32], strides = [1, 1]} : vector<8x32xf32> to vector<1x32xf32>
    %49 = vector.broadcast %48 : vector<1x32xf32> to vector<16x32xf32>
    %50 = arith.mulf %38, %49 : vector<16x32xf32>
    %51 = vector.extract_strided_slice %7 {offsets = [2, 0], sizes = [1, 32], strides = [1, 1]} : vector<8x32xf32> to vector<1x32xf32>
    %52 = vector.broadcast %51 : vector<1x32xf32> to vector<16x32xf32>
    %53 = arith.mulf %38, %52 : vector<16x32xf32>
    %54 = vector.extract_strided_slice %7 {offsets = [3, 0], sizes = [1, 32], strides = [1, 1]} : vector<8x32xf32> to vector<1x32xf32>
    %55 = vector.broadcast %54 : vector<1x32xf32> to vector<16x32xf32>
    %56 = arith.mulf %38, %55 : vector<16x32xf32>
    %57 = vector.extract_strided_slice %7 {offsets = [4, 0], sizes = [1, 32], strides = [1, 1]} : vector<8x32xf32> to vector<1x32xf32>
    %58 = vector.broadcast %57 : vector<1x32xf32> to vector<16x32xf32>
    %59 = arith.mulf %38, %58 : vector<16x32xf32>
    %60 = vector.extract_strided_slice %7 {offsets = [5, 0], sizes = [1, 32], strides = [1, 1]} : vector<8x32xf32> to vector<1x32xf32>
    %61 = vector.broadcast %60 : vector<1x32xf32> to vector<16x32xf32>
    %62 = arith.mulf %38, %61 : vector<16x32xf32>
    %63 = vector.extract_strided_slice %7 {offsets = [6, 0], sizes = [1, 32], strides = [1, 1]} : vector<8x32xf32> to vector<1x32xf32>
    %64 = vector.broadcast %63 : vector<1x32xf32> to vector<16x32xf32>
    %65 = arith.mulf %38, %64 : vector<16x32xf32>
    %66 = vector.extract_strided_slice %7 {offsets = [7, 0], sizes = [1, 32], strides = [1, 1]} : vector<8x32xf32> to vector<1x32xf32>
    %67 = vector.broadcast %66 : vector<1x32xf32> to vector<16x32xf32>
    %68 = arith.mulf %38, %67 : vector<16x32xf32>
    %69 = tpu.concatenate %47, %50, %53, %56, %59, %62, %65, %68 in 0 : vector<16x32xf32>, vector<16x32xf32>, vector<16x32xf32>, vector<16x32xf32>, vector<16x32xf32>, vector<16x32xf32>, vector<16x32xf32>, vector<16x32xf32> -> vector<128x32xf32>
    %cst_17 = arith.constant dense<0.000000e+00> : vector<128x48xf32>
    %70 = tpu.matmul %69, %43, %cst_17 {dimension_numbers = #tpu.dot_dimension_numbers<[1], [1], [0], [0], [0, 0, 1, 0], [], []>} : vector<128x32xf32>, vector<48x32xf32>, vector<128x48xf32> -> vector<128x48xf32>
    %c0_18 = arith.constant 0 : index
    %c0_19 = arith.constant 0 : index
    %71 = vector.load %arg1[%c0_18, %c0_19] : memref<16x2xi32, #tpu.memory_space<vmem>>, vector<16x2xi32>
    %72 = tpu.concatenate %71, %71, %71, %71, %71, %71, %71, %71 in 0 : vector<16x2xi32>, vector<16x2xi32>, vector<16x2xi32>, vector<16x2xi32>, vector<16x2xi32>, vector<16x2xi32>, vector<16x2xi32>, vector<16x2xi32> -> vector<128x2xi32>
    %73 = vector.extract_strided_slice %72 {offsets = [0, 0], sizes = [128, 1], strides = [1, 1]} : vector<128x2xi32> to vector<128x1xi32>
    %74 = vector.extract_strided_slice %72 {offsets = [0, 1], sizes = [128, 1], strides = [1, 1]} : vector<128x2xi32> to vector<128x1xi32>
    %c0_20 = arith.constant 0 : index
    %c0_21 = arith.constant 0 : index
    %75 = vector.load %arg2[%c0_20, %c0_21] : memref<1x48xi32, #tpu.memory_space<vmem>>, vector<1x48xi32>
    %76 = vector.broadcast %75 : vector<1x48xi32> to vector<128x48xi32>
    %77 = vector.broadcast %73 : vector<128x1xi32> to vector<128x48xi32>
    %78 = arith.cmpi sle, %76, %77 : vector<128x48xi32>
    %79 = vector.broadcast %75 : vector<1x48xi32> to vector<128x48xi32>
    %80 = vector.broadcast %74 : vector<128x1xi32> to vector<128x48xi32>
    %81 = arith.cmpi sge, %79, %80 : vector<128x48xi32>
    %82 = arith.andi %78, %81 : vector<128x48xi1>
    %cst_22 = arith.constant -1.000000e+30 : f32
    %83 = vector.broadcast %cst_22 : f32 to vector<128x48xf32>
    %84 = arith.select %82, %70, %83 : vector<128x48xi1>, vector<128x48xf32>
    %cst_23 = arith.constant dense<0xFF800000> : vector<128xf32>
    %85 = vector.multi_reduction <maximumf>, %84, %cst_23 [1] : vector<128x48xf32> to vector<128xf32>
    %86 = vector.shape_cast %85 : vector<128xf32> to vector<128x1xf32>
    %87 = vector.broadcast %86 : vector<128x1xf32> to vector<128x48xf32>
    %88 = arith.subf %84, %87 : vector<128x48xf32>
    %89 = math.exp %88 : vector<128x48xf32>
    %cst_24 = arith.constant dense<0.000000e+00> : vector<128xf32>
    %90 = vector.multi_reduction <add>, %89, %cst_24 [1] : vector<128x48xf32> to vector<128xf32>
    %91 = vector.shape_cast %90 : vector<128xf32> to vector<128x1xf32>
    %cst_25 = arith.constant dense<0.000000e+00> : vector<128x32xf32>
    %92 = tpu.matmul %89, %44, %cst_25 {dimension_numbers = #tpu.dot_dimension_numbers<[1], [0], [0], [1], [0, 0, 1, 1], [], []>} : vector<128x48xf32>, vector<48x32xf32>, vector<128x32xf32> -> vector<128x32xf32>
    %93 = tpu.reciprocal %91 {approx = true} : vector<128x1xf32> -> vector<128x1xf32>
    %94 = vector.broadcast %93 : vector<128x1xf32> to vector<128x32xf32>
    %95 = arith.mulf %92, %94 : vector<128x32xf32>
    %96 = vector.extract_strided_slice %95 {offsets = [0, 0], sizes = [16, 32], strides = [1, 1]} : vector<128x32xf32> to vector<16x32xf32>
    %97 = vector.extract_strided_slice %7 {offsets = [0, 0], sizes = [1, 32], strides = [1, 1]} : vector<8x32xf32> to vector<1x32xf32>
    %98 = vector.broadcast %97 : vector<1x32xf32> to vector<16x32xf32>
    %99 = arith.mulf %96, %98 : vector<16x32xf32>
    %100 = vector.extract_strided_slice %95 {offsets = [16, 0], sizes = [16, 32], strides = [1, 1]} : vector<128x32xf32> to vector<16x32xf32>
    %101 = vector.extract_strided_slice %7 {offsets = [1, 0], sizes = [1, 32], strides = [1, 1]} : vector<8x32xf32> to vector<1x32xf32>
    %102 = vector.broadcast %101 : vector<1x32xf32> to vector<16x32xf32>
    %103 = arith.mulf %100, %102 : vector<16x32xf32>
    %104 = arith.addf %99, %103 : vector<16x32xf32>
    %105 = vector.extract_strided_slice %95 {offsets = [32, 0], sizes = [16, 32], strides = [1, 1]} : vector<128x32xf32> to vector<16x32xf32>
    %106 = vector.extract_strided_slice %7 {offsets = [2, 0], sizes = [1, 32], strides = [1, 1]} : vector<8x32xf32> to vector<1x32xf32>
    %107 = vector.broadcast %106 : vector<1x32xf32> to vector<16x32xf32>
    %108 = arith.mulf %105, %107 : vector<16x32xf32>
    %109 = arith.addf %104, %108 : vector<16x32xf32>
    %110 = vector.extract_strided_slice %95 {offsets = [48, 0], sizes = [16, 32], strides = [1, 1]} : vector<128x32xf32> to vector<16x32xf32>
    %111 = vector.extract_strided_slice %7 {offsets = [3, 0], sizes = [1, 32], strides = [1, 1]} : vector<8x32xf32> to vector<1x32xf32>
    %112 = vector.broadcast %111 : vector<1x32xf32> to vector<16x32xf32>
    %113 = arith.mulf %110, %112 : vector<16x32xf32>
    %114 = arith.addf %109, %113 : vector<16x32xf32>
    %115 = vector.extract_strided_slice %95 {offsets = [64, 0], sizes = [16, 32], strides = [1, 1]} : vector<128x32xf32> to vector<16x32xf32>
    %116 = vector.extract_strided_slice %7 {offsets = [4, 0], sizes = [1, 32], strides = [1, 1]} : vector<8x32xf32> to vector<1x32xf32>
    %117 = vector.broadcast %116 : vector<1x32xf32> to vector<16x32xf32>
    %118 = arith.mulf %115, %117 : vector<16x32xf32>
    %119 = arith.addf %114, %118 : vector<16x32xf32>
    %120 = vector.extract_strided_slice %95 {offsets = [80, 0], sizes = [16, 32], strides = [1, 1]} : vector<128x32xf32> to vector<16x32xf32>
    %121 = vector.extract_strided_slice %7 {offsets = [5, 0], sizes = [1, 32], strides = [1, 1]} : vector<8x32xf32> to vector<1x32xf32>
    %122 = vector.broadcast %121 : vector<1x32xf32> to vector<16x32xf32>
    %123 = arith.mulf %120, %122 : vector<16x32xf32>
    %124 = arith.addf %119, %123 : vector<16x32xf32>
    %125 = vector.extract_strided_slice %95 {offsets = [96, 0], sizes = [16, 32], strides = [1, 1]} : vector<128x32xf32> to vector<16x32xf32>
    %126 = vector.extract_strided_slice %7 {offsets = [6, 0], sizes = [1, 32], strides = [1, 1]} : vector<8x32xf32> to vector<1x32xf32>
    %127 = vector.broadcast %126 : vector<1x32xf32> to vector<16x32xf32>
    %128 = arith.mulf %125, %127 : vector<16x32xf32>
    %129 = arith.addf %124, %128 : vector<16x32xf32>
    %130 = vector.extract_strided_slice %95 {offsets = [112, 0], sizes = [16, 32], strides = [1, 1]} : vector<128x32xf32> to vector<16x32xf32>
    %131 = vector.extract_strided_slice %7 {offsets = [7, 0], sizes = [1, 32], strides = [1, 1]} : vector<8x32xf32> to vector<1x32xf32>
    %132 = vector.broadcast %131 : vector<1x32xf32> to vector<16x32xf32>
    %133 = arith.mulf %130, %132 : vector<16x32xf32>
    %134 = arith.addf %129, %133 : vector<16x32xf32>
    %135 = vector.extract_strided_slice %31 {offsets = [0, 96], sizes = [32, 32], strides = [1, 1]} : vector<32x128xf32> to vector<32x32xf32>
    %cst_26 = arith.constant dense<0.000000e+00> : vector<16x32xf32>
    %136 = tpu.matmul %134, %135, %cst_26 {dimension_numbers = #tpu.dot_dimension_numbers<[1], [0], [0], [1], [0, 0, 1, 1], [], []>} : vector<16x32xf32>, vector<32x32xf32>, vector<16x32xf32> -> vector<16x32xf32>
    %137 = vector.broadcast %5 : vector<1x32xf32> to vector<16x32xf32>
    %138 = arith.addf %136, %137 : vector<16x32xf32>
    %cst_27 = arith.constant dense<0.000000e+00> : vector<16xf32>
    %139 = vector.multi_reduction <add>, %138, %cst_27 [1] : vector<16x32xf32> to vector<16xf32>
    %140 = vector.shape_cast %139 : vector<16xf32> to vector<16x1xf32>
    %cst_28 = arith.constant 3.200000e+01 : f32
    %141 = vector.broadcast %cst_28 : f32 to vector<16x1xf32>
    %142 = arith.divf %140, %141 : vector<16x1xf32>
    %143 = vector.broadcast %142 : vector<16x1xf32> to vector<16x32xf32>
    %144 = arith.subf %138, %143 : vector<16x32xf32>
    %145 = arith.mulf %144, %144 : vector<16x32xf32>
    %cst_29 = arith.constant dense<0.000000e+00> : vector<16xf32>
    %146 = vector.multi_reduction <add>, %145, %cst_29 [1] : vector<16x32xf32> to vector<16xf32>
    %147 = vector.shape_cast %146 : vector<16xf32> to vector<16x1xf32>
    %cst_30 = arith.constant 3.200000e+01 : f32
    %148 = vector.broadcast %cst_30 : f32 to vector<16x1xf32>
    %149 = arith.divf %147, %148 : vector<16x1xf32>
    %150 = vector.broadcast %142 : vector<16x1xf32> to vector<16x32xf32>
    %151 = arith.subf %138, %150 : vector<16x32xf32>
    %cst_31 = arith.constant 9.99999974E-6 : f32
    %152 = vector.broadcast %cst_31 : f32 to vector<16x1xf32>
    %153 = arith.addf %149, %152 : vector<16x1xf32>
    %154 = math.rsqrt %153 : vector<16x1xf32>
    %155 = vector.broadcast %154 : vector<16x1xf32> to vector<16x32xf32>
    %156 = arith.mulf %151, %155 : vector<16x32xf32>
    %157 = vector.broadcast %3 : vector<1x32xf32> to vector<16x32xf32>
    %158 = arith.mulf %156, %157 : vector<16x32xf32>
    %159 = vector.broadcast %4 : vector<1x32xf32> to vector<16x32xf32>
    %160 = arith.addf %158, %159 : vector<16x32xf32>
    %c0_32 = arith.constant 0 : index
    %c0_33 = arith.constant 0 : index
    %161 = vector.load %arg7[%c0_32, %c0_33] : memref<32x128xf32, #tpu.memory_space<vmem>>, vector<32x128xf32>
    %cst_34 = arith.constant dense<0.000000e+00> : vector<16x128xf32>
    %162 = tpu.matmul %160, %161, %cst_34 {dimension_numbers = #tpu.dot_dimension_numbers<[1], [0], [0], [1], [0, 0, 1, 1], [], []>} : vector<16x32xf32>, vector<32x128xf32>, vector<16x128xf32> -> vector<16x128xf32>
    %cst_35 = arith.constant 0.000000e+00 : f32
    %163 = vector.broadcast %cst_35 : f32 to vector<16x128xf32>
    %164 = arith.maximumf %162, %163 : vector<16x128xf32>
    %c0_36 = arith.constant 0 : index
    %c0_37 = arith.constant 0 : index
    %165 = vector.load %arg8[%c0_36, %c0_37] : memref<128x32xf32, #tpu.memory_space<vmem>>, vector<128x32xf32>
    %cst_38 = arith.constant dense<0.000000e+00> : vector<16x32xf32>
    %166 = tpu.matmul %164, %165, %cst_38 {dimension_numbers = #tpu.dot_dimension_numbers<[1], [0], [0], [1], [0, 0, 1, 1], [], []>} : vector<16x128xf32>, vector<128x32xf32>, vector<16x32xf32> -> vector<16x32xf32>
    %167 = vector.broadcast %6 : vector<1x32xf32> to vector<16x32xf32>
    %168 = arith.addf %166, %167 : vector<16x32xf32>
    %169 = arith.addf %168, %138 : vector<16x32xf32>
    %c0_39 = arith.constant 0 : index
    %c0_40 = arith.constant 0 : index
    %170 = vector.load %arg10[%c0_39, %c0_40] : memref<16x32xf32, #tpu.memory_space<vmem>>, vector<16x32xf32>
    tpu.vector_store %arg10[%c0_39, %c0_40], %169 {strides = array<i32>} : memref<16x32xf32, #tpu.memory_space<vmem>>, vector<16x32xf32>,
    %171 = vector.extract_strided_slice %41 {offsets = [8, 0], sizes = [8, 32], strides = [1, 1]} : vector<32x32xf32> to vector<8x32xf32>
    %c0_41 = arith.constant 0 : index
    %c0_42 = arith.constant 0 : index
    %172 = vector.load %arg11[%c0_41, %c0_42] : memref<32x32xf32, #tpu.memory_space<vmem>>, vector<8x32xf32>
    tpu.vector_store %arg11[%c0_41, %c0_42], %171 {strides = array<i32>} : memref<32x32xf32, #tpu.memory_space<vmem>>, vector<8x32xf32>,
    %173 = vector.extract_strided_slice %42 {offsets = [8, 0], sizes = [8, 32], strides = [1, 1]} : vector<32x32xf32> to vector<8x32xf32>
    %c0_43 = arith.constant 0 : index
    %c0_44 = arith.constant 0 : index
    %174 = vector.load %arg12[%c0_43, %c0_44] : memref<32x32xf32, #tpu.memory_space<vmem>>, vector<8x32xf32>
    tpu.vector_store %arg12[%c0_43, %c0_44], %173 {strides = array<i32>} : memref<32x32xf32, #tpu.memory_space<vmem>>, vector<8x32xf32>,
    %175 = vector.extract_strided_slice %39 {offsets = [0, 0], sizes = [8, 32], strides = [1, 1]} : vector<16x32xf32> to vector<8x32xf32>
    %c8 = arith.constant 8 : index
    %c0_45 = arith.constant 0 : index
    %176 = vector.load %arg11[%c8, %c0_45] : memref<32x32xf32, #tpu.memory_space<vmem>>, vector<8x32xf32>
    tpu.vector_store %arg11[%c8, %c0_45], %175 {strides = array<i32>} : memref<32x32xf32, #tpu.memory_space<vmem>>, vector<8x32xf32>,
    %177 = vector.extract_strided_slice %40 {offsets = [0, 0], sizes = [8, 32], strides = [1, 1]} : vector<16x32xf32> to vector<8x32xf32>
    %c8_46 = arith.constant 8 : index
    %c0_47 = arith.constant 0 : index
    %178 = vector.load %arg12[%c8_46, %c0_47] : memref<32x32xf32, #tpu.memory_space<vmem>>, vector<8x32xf32>
    tpu.vector_store %arg12[%c8_46, %c0_47], %177 {strides = array<i32>} : memref<32x32xf32, #tpu.memory_space<vmem>>, vector<8x32xf32>,
    %179 = vector.extract_strided_slice %41 {offsets = [24, 0], sizes = [8, 32], strides = [1, 1]} : vector<32x32xf32> to vector<8x32xf32>
    %c16 = arith.constant 16 : index
    %c0_48 = arith.constant 0 : index
    %180 = vector.load %arg11[%c16, %c0_48] : memref<32x32xf32, #tpu.memory_space<vmem>>, vector<8x32xf32>
    tpu.vector_store %arg11[%c16, %c0_48], %179 {strides = array<i32>} : memref<32x32xf32, #tpu.memory_space<vmem>>, vector<8x32xf32>,
    %181 = vector.extract_strided_slice %42 {offsets = [24, 0], sizes = [8, 32], strides = [1, 1]} : vector<32x32xf32> to vector<8x32xf32>
    %c16_49 = arith.constant 16 : index
    %c0_50 = arith.constant 0 : index
    %182 = vector.load %arg12[%c16_49, %c0_50] : memref<32x32xf32, #tpu.memory_space<vmem>>, vector<8x32xf32>
    tpu.vector_store %arg12[%c16_49, %c0_50], %181 {strides = array<i32>} : memref<32x32xf32, #tpu.memory_space<vmem>>, vector<8x32xf32>,
    %183 = vector.extract_strided_slice %39 {offsets = [8, 0], sizes = [8, 32], strides = [1, 1]} : vector<16x32xf32> to vector<8x32xf32>
    %c24 = arith.constant 24 : index
    %c0_51 = arith.constant 0 : index
    %184 = vector.load %arg11[%c24, %c0_51] : memref<32x32xf32, #tpu.memory_space<vmem>>, vector<8x32xf32>
    tpu.vector_store %arg11[%c24, %c0_51], %183 {strides = array<i32>} : memref<32x32xf32, #tpu.memory_space<vmem>>, vector<8x32xf32>,
    %185 = vector.extract_strided_slice %40 {offsets = [8, 0], sizes = [8, 32], strides = [1, 1]} : vector<16x32xf32> to vector<8x32xf32>
    %c24_52 = arith.constant 24 : index
    %c0_53 = arith.constant 0 : index
    %186 = vector.load %arg12[%c24_52, %c0_53] : memref<32x32xf32, #tpu.memory_space<vmem>>, vector<8x32xf32>
    tpu.vector_store %arg12[%c24_52, %c0_53], %185 {strides = array<i32>} : memref<32x32xf32, #tpu.memory_space<vmem>>, vector<8x32xf32>,
    return
  }
}

</mosaic_0001>

<llo_original>
// kernel: residual_recurrent_block.1
$region0: #{residual_recurrent_block.1}
  #allocation0 [shape = 'u32[]', space=smem, size = 0x4, offset = 0x4, fixed_abs, tag = 'smem constant byte address 0x4 - core index']
  #allocation1 [shape = 'u32[144,128]{1,0:T(1,128)}', space=vmem, size = 0x12000, scoped, tag = 'internal scratch']
  %s0 = inlined_call_operand.vmem [shape: f32[16,32], index: 0, kind: input, shape index: {}]
  %s1 = inlined_call_operand.vmem [shape: s32[16,2], index: 1, kind: input, shape index: {}]
  %s2 = inlined_call_operand.vmem [shape: s32[1,48], index: 2, kind: input, shape index: {}]
  %s3 = inlined_call_operand.vmem [shape: f32[32,32], index: 3, kind: input, shape index: {}, may-alias: {3,11}]
  %s4 = inlined_call_operand.vmem [shape: f32[32,32], index: 4, kind: input, shape index: {}, may-alias: {4,12}]
  %s5 = inlined_call_operand.vmem [shape: f32[32,128], index: 5, kind: input, shape index: {}]
  %s6 = inlined_call_operand.vmem [shape: f32[1,128], index: 6, kind: input, shape index: {}]
  %s7 = inlined_call_operand.vmem [shape: f32[32,128], index: 7, kind: input, shape index: {}]
  %s8 = inlined_call_operand.vmem [shape: f32[128,32], index: 8, kind: input, shape index: {}]
  %s9 = inlined_call_operand.vmem [shape: f32[14,32], index: 9, kind: input, shape index: {}]
  %s10 = inlined_call_operand.hbm [shape: f32[16,32], index: 10, kind: output, shape index: {0}]
  %s11 = inlined_call_operand.vmem [shape: f32[32,32], index: 11, kind: output, shape index: {1}, may-alias: {3,11}]
  %s12 = inlined_call_operand.vmem [shape: f32[32,32], index: 12, kind: output, shape index: {2}, may-alias: {4,12}]
  %13 = xla_tuple %s10, %s11, %s12
  %s14 = sld [smem:[#allocation0]]
  $region66: #{residual_recurrent_block.1} parent=0
    _
  %s16 = ssub.s32 1, %s14
  %s17 = scalar_select 0, %s16, %s14
  $region1: #{residual_recurrent_block.1} parent=0
    #allocation2 [shape = 'u8[8192]{0}', space=vmem, size = 0x2000, scoped, tag = 'output window, operand 0, single buffered']
    #allocation3 [shape = 's32[1]{0}', space=sflag, size = 0x4, scoped, tag = 'scoped memory for residual_recurrent_block.1']
    %18 = vsyncpa [#allocation3], 0
    // Predicated region
    $region2: #{residual_recurrent_block.1} parent=1 // pred_check
      _
    $region3: #{residual_recurrent_block.1} parent=1 // pred_check_branch
      %20 = sbr.rel (0) target = $region5
    $region4: #{residual_recurrent_block.1} parent=1 // pred_region
      _
    $region5: #{residual_recurrent_block.1} parent=1 // pred_fallthru
      _
    // Predicated region
    $region6: #{residual_recurrent_block.1} parent=1 // pred_check
      _
    $region7: #{residual_recurrent_block.1} parent=1 // pred_check_branch
      %22 = sbr.rel (0) target = $region9
    $region8: #{residual_recurrent_block.1} parent=1 // pred_region
      _
    $region9: #{residual_recurrent_block.1} parent=1 // pred_fallthru
      _
    // Predicated region
    $region10: #{residual_recurrent_block.1} parent=1 // pred_check
      _
    $region11: #{residual_recurrent_block.1} parent=1 // pred_check_branch
      %24 = sbr.rel (0) target = $region13
    $region12: #{residual_recurrent_block.1} parent=1 // pred_region
      _
    $region13: #{residual_recurrent_block.1} parent=1 // pred_fallthru
      _
    // Predicated region
    $region14: #{residual_recurrent_block.1} parent=1 // pred_check
      _
    $region15: #{residual_recurrent_block.1} parent=1 // pred_check_branch
      %26 = sbr.rel (0) target = $region17
    $region16: #{residual_recurrent_block.1} parent=1 // pred_region
      _
    $region17: #{residual_recurrent_block.1} parent=1 // pred_fallthru
      _
    // Predicated region
    $region18: #{residual_recurrent_block.1} parent=1 // pred_check
      _
    $region19: #{residual_recurrent_block.1} parent=1 // pred_check_branch
      %28 = sbr.rel (0) target = $region21
    $region20: #{residual_recurrent_block.1} parent=1 // pred_region
      _
    $region21: #{residual_recurrent_block.1} parent=1 // pred_fallthru
      _
    // Predicated region
    $region22: #{residual_recurrent_block.1} parent=1 // pred_check
      _
    $region23: #{residual_recurrent_block.1} parent=1 // pred_check_branch
      %30 = sbr.rel (0) target = $region25
    $region24: #{residual_recurrent_block.1} parent=1 // pred_region
      _
    $region25: #{residual_recurrent_block.1} parent=1 // pred_fallthru
      _
    // Predicated region
    $region26: #{residual_recurrent_block.1} parent=1 // pred_check
      _
    $region27: #{residual_recurrent_block.1} parent=1 // pred_check_branch
      %32 = sbr.rel (0) target = $region29
    $region28: #{residual_recurrent_block.1} parent=1 // pred_region
      _
    $region29: #{residual_recurrent_block.1} parent=1 // pred_fallthru
      _
    // Predicated region
    $region30: #{residual_recurrent_block.1} parent=1 // pred_check
      _
    $region31: #{residual_recurrent_block.1} parent=1 // pred_check_branch
      %34 = sbr.rel (0) target = $region33
    $region32: #{residual_recurrent_block.1} parent=1 // pred_region
      _
    $region33: #{residual_recurrent_block.1} parent=1 // pred_fallthru
      _
    // Predicated region
    $region34: #{residual_recurrent_block.1} parent=1 // pred_check
      _
    $region35: #{residual_recurrent_block.1} parent=1 // pred_check_branch
      %36 = sbr.rel (0) target = $region37
    $region36: #{residual_recurrent_block.1} parent=1 // pred_region
      _
    $region37: #{residual_recurrent_block.1} parent=1 // pred_fallthru
      _
    // Predicated region
    $region38: #{residual_recurrent_block.1} parent=1 // pred_check
      _
    $region39: #{residual_recurrent_block.1} parent=1 // pred_check_branch
      %38 = sbr.rel (0) target = $region41
    $region40: #{residual_recurrent_block.1} parent=1 // pred_region
      _
    $region41: #{residual_recurrent_block.1} parent=1 // pred_fallthru
      _
    %v39 = vld [vmem:[%s9] sm:$0xff]
    %v40 = vld [vmem:[%s9 + $0x8] sm:$0x3f]
    %v41 = vld [vmem:[%s0] sm:$0xff]
    %v42 = vld [vmem:[%s0 + $0x8] sm:$0xff]
    %vm43 = vcmask 261120
    %v44 = vsel %vm43, %v41, 0.0
    %45 = vadd.xlane.f32.xlu0 %v44
    %v46 = vpop.xlane.xlu0 %45
    %v47 = vsel %vm43, %v42, 0.0
    %48 = vadd.xlane.f32.xlu0 %v47
    %v49 = vpop.xlane.xlu0 %48
    %v50 = vrcp.pop 32.0
    %v51 = vmul.f32 %v46, %v50
    %v52 = vmul.f32 %v49, %v50
    %v53 = vsub.f32 %v41, %v51
    %v54 = vsub.f32 %v42, %v52
    %v55 = vmul.f32 %v53, %v53
    %v56 = vmul.f32 %v54, %v54
    %v57 = vsel %vm43, %v55, 0.0
    %58 = vadd.xlane.f32.xlu0 %v57
    %v59 = vpop.xlane.xlu0 %58
    %v60 = vsel %vm43, %v56, 0.0
    %61 = vadd.xlane.f32.xlu0 %v60
    %v62 = vpop.xlane.xlu0 %61
    %v63 = vmul.f32 %v59, %v50
    %v64 = vmul.f32 %v62, %v50
    %v65 = vadd.f32 %v63, 1e-05
    %v66 = vadd.f32 %v64, 1e-05
    %v67 = vrsqrt.pop %v65
    %v68 = vrsqrt.pop %v66
    %v69 = vmul.f32 %v53, %v67
    %v70 = vmul.f32 %v54, %v68
    %v71 = vlaneseq
    %v72 = vshrl.u32 %v71, 7
    %v73 = vsub.s32 0, %v72
    %v74 = vrot.slane %v39, %v73
    %v75 = vmul.f32 %v69, %v74
    %v76 = vmul.f32 %v70, %v74
    %v77 = vlaneseq
    %v78 = vshrl.u32 %v77, 7
    %v79 = vsub.s32 1, %v78
    %v80 = vrot.slane %v39, %v79
    %v81 = vadd.f32 %v75, %v80
    %v82 = vadd.f32 %v76, %v80
    %v83 = vld [vmem:[%s5] sm:$0xff]
    %v84 = vld [vmem:[%s5 + $0x8] sm:$0xff]
    %v85 = vld [vmem:[%s5 + $0x10] sm:$0xff]
    %v86 = vld [vmem:[%s5 + $0x18] sm:$0xff]
    %v87 = vld [vmem:[%s6] sm:$0x1]
    %v89 = vlaneseq
    %v90 = vshrl.u32 %v89, 7
    %v91 = vsub.s32 0, %v90
    %v92 = vrot.slane %v87, %v91
    %v95 = vsel %vm43, %v81, 0
    %v98 = vsel %vm43, %v82, 0
    %100 = vmatprep.subr.mxu0 0.0
    %101 = vmatpush1.msra.mxu0 0.0
    %102 = vmatprep.subr.mxu0 0.0
    %103 = vmatpush1.msra.mxu0 0.0
    %104 = vmatprep.subr.mxu0 0.0
    %105 = vmatpush1.msra.mxu0 0.0
    %106 = vmatprep.subr.mxu0 0.0
    %107 = vmatpush1.msra.mxu0 0.0
    %108 = vmatprep.subr.mxu0 0.0
    %109 = vmatpush1.msra.mxu0 0.0
    %110 = vmatprep.subr.mxu0 0.0
    %111 = vmatpush1.msra.mxu0 0.0
    %112 = vmatprep.subr.mxu0 0.0
    %113 = vmatpush1.msra.mxu0 0.0
    %114 = vmatprep.subr.mxu0 0.0
    %115 = vmatpush1.msra.mxu0 0.0
    %116 = vmatprep.subr.mxu0 0.0
    %117 = vmatpush1.msra.mxu0 0.0
    %118 = vmatprep.subr.mxu0 0.0
    %119 = vmatpush1.msra.mxu0 0.0
    %120 = vmatprep.subr.mxu0 0.0
    %121 = vmatpush1.msra.mxu0 0.0
    %122 = vmatprep.subr.mxu0 0.0
    %123 = vmatpush1.msra.mxu0 0.0
    %124 = vmatprep.subr.mxu0 0.0
    %125 = vmatpush1.msra.mxu0 %v86
    %126 = vmatprep.subr.mxu0 0.0
    %127 = vmatpush1.msra.mxu0 %v85
    %128 = vmatprep.subr.mxu0 0.0
    %129 = vmatpush1.msra.mxu0 %v84
    %130 = vmatprep.subr.mxu0 0.0
    %131 = vmatpush1.msra.mxu0 %v83
    %132 = vmatprep.subr.mxu0 0.0
    %133 = vmatpush2.msra.mxu0 0.0
    %134 = vmatprep.subr.mxu0 0.0
    %135 = vmatpush2.msra.mxu0 0.0
    %136 = vmatprep.subr.mxu0 0.0
    %137 = vmatpush2.msra.mxu0 0.0
    %138 = vmatprep.subr.mxu0 0.0
    %139 = vmatpush2.msra.mxu0 0.0
    %140 = vmatprep.subr.mxu0 0.0
    %141 = vmatpush2.msra.mxu0 0.0
    %142 = vmatprep.subr.mxu0 0.0
    %143 = vmatpush2.msra.mxu0 0.0
    %144 = vmatprep.subr.mxu0 0.0
    %145 = vmatpush2.msra.mxu0 0.0
    %146 = vmatprep.subr.mxu0 0.0
    %147 = vmatpush2.msra.mxu0 0.0
    %148 = vmatprep.subr.mxu0 0.0
    %149 = vmatpush2.msra.mxu0 0.0
    %150 = vmatprep.subr.mxu0 0.0
    %151 = vmatpush2.msra.mxu0 0.0
    %152 = vmatprep.subr.mxu0 0.0
    %153 = vmatpush2.msra.mxu0 0.0
    %154 = vmatprep.subr.mxu0 0.0
    %155 = vmatpush2.msra.mxu0 0.0
    %156 = vmatprep.subr.mxu0 0.0
    %157 = vmatpush2.msra.mxu0 0.0
    %158 = vmatprep.subr.mxu0 0.0
    %159 = vmatpush2.msra.mxu0 0.0
    %160 = vmatprep.subr.mxu0 0.0
    %161 = vmatpush2.msra.mxu0 0.0
    %162 = vmatprep.subr.mxu0 0.0
    %163 = vmatpush2.msra.mxu0 0.0
    %164 = vmatprep.mubr.f32.mxu0 0.0
    %165 = vmatmul.mubr.f32.gmra.mxu0 %v95
    %v166 = vpop.f32.mrf.mxu0
    %v167 = vadd.f32 %v92, %v166
    %v168 = vpop.f32.mrf.mxu0
    %169 = vmatprep.mubr.f32.mxu0 0.0
    %170 = vmatmul.mubr.f32.gmra.mxu0 %v98
    %v171 = vpop.f32.mrf.mxu0
    %v172 = vadd.f32 %v92, %v171
    %v173 = vpop.f32.mrf.mxu0
    %174 = vdwg.mxu0
    %v175 = vmul.f32 %v167, 0.25
    %v176 = vmul.f32 %v172, 0.25
    %v177 = vld [vmem:[%s3] sm:$0xff]
    %v178 = vld [vmem:[%s3 + $0x8] sm:$0xff]
    %v179 = vld [vmem:[%s3 + $0x10] sm:$0xff]
    %v180 = vld [vmem:[%s3 + $0x18] sm:$0xff]
    %v181 = vld [vmem:[%s4] sm:$0xff]
    %v182 = vld [vmem:[%s4 + $0x8] sm:$0xff]
    %v183 = vld [vmem:[%s4 + $0x10] sm:$0xff]
    %v184 = vld [vmem:[%s4 + $0x18] sm:$0xff]
    %187 = vrot.lane.b32.xlu0 %v167, 96
    %v188 = vpop.permute.xlu0 %187
    %189 = vrot.lane.b32.xlu0 %v172, 96
    %v190 = vpop.permute.xlu0 %189
    %191 = vrot.lane.b32.xlu0 %v167, 64
    %v192 = vpop.permute.xlu0 %191
    %193 = vrot.lane.b32.xlu0 %v172, 64
    %v194 = vpop.permute.xlu0 %193
    %v197 = vlaneseq
    %v198 = vshrl.u32 %v197, 7
    %v199 = vsub.s32 6, %v198
    %v200 = vrot.slane %v39, %v199
    %v201 = vmul.f32 %v175, %v200
    %v202 = vmul.f32 %v176, %v200
    %v203 = vlaneseq
    %v204 = vshrl.u32 %v203, 7
    %v205 = vsub.s32 7, %v204
    %v206 = vrot.slane %v39, %v205
    %v207 = vmul.f32 %v175, %v206
    %v208 = vmul.f32 %v176, %v206
    %v209 = vlaneseq
    %v210 = vshrl.u32 %v209, 7
    %v211 = vsub.s32 0, %v210
    %v212 = vrot.slane %v40, %v211
    %v213 = vmul.f32 %v175, %v212
    %v214 = vmul.f32 %v176, %v212
    %v215 = vlaneseq
    %v216 = vshrl.u32 %v215, 7
    %v217 = vsub.s32 1, %v216
    %v218 = vrot.slane %v40, %v217
    %v219 = vmul.f32 %v175, %v218
    %v220 = vmul.f32 %v176, %v218
    %v221 = vlaneseq
    %v222 = vshrl.u32 %v221, 7
    %v223 = vsub.s32 2, %v222
    %v224 = vrot.slane %v40, %v223
    %v225 = vmul.f32 %v175, %v224
    %v226 = vmul.f32 %v176, %v224
    %v227 = vlaneseq
    %v228 = vshrl.u32 %v227, 7
    %v229 = vsub.s32 3, %v228
    %v230 = vrot.slane %v40, %v229
    %v231 = vmul.f32 %v175, %v230
    %v232 = vmul.f32 %v176, %v230
    %v233 = vlaneseq
    %v234 = vshrl.u32 %v233, 7
    %v235 = vsub.s32 4, %v234
    %v236 = vrot.slane %v40, %v235
    %v237 = vmul.f32 %v175, %v236
    %v238 = vmul.f32 %v176, %v236
    %v239 = vlaneseq
    %v240 = vshrl.u32 %v239, 7
    %v241 = vsub.s32 5, %v240
    %v242 = vrot.slane %v40, %v241
    %v243 = vmul.f32 %v175, %v242
    %v244 = vmul.f32 %v176, %v242
    %v246 = vsel %vm43, %v201, 0
    %v249 = vsel %vm43, %v202, 0
    %v252 = vsel %vm43, %v207, 0
    %v255 = vsel %vm43, %v208, 0
    %v258 = vsel %vm43, %v213, 0
    %v261 = vsel %vm43, %v214, 0
    %v264 = vsel %vm43, %v219, 0
    %v267 = vsel %vm43, %v220, 0
    %v270 = vsel %vm43, %v225, 0
    %v273 = vsel %vm43, %v226, 0
    %v276 = vsel %vm43, %v231, 0
    %v279 = vsel %vm43, %v232, 0
    %v282 = vsel %vm43, %v237, 0
    %v285 = vsel %vm43, %v238, 0
    %v288 = vsel %vm43, %v243, 0
    %v291 = vsel %vm43, %v244, 0
    %v294 = vsel %vm43, %v177, 0
    %v297 = vsel %vm43, %v178, 0
    %v300 = vsel %vm43, %v179, 0
    %v303 = vsel %vm43, %v180, 0
    %v305 = vsel %vm43, %v188, 0
    %v307 = vsel %vm43, %v190, 0
    %309 = vmatprep.subr.mxu0 0.0
    %310 = vmatpush1.xpose.msra.mxu0 0.0
    %311 = vmatprep.subr.mxu0 0.0
    %312 = vmatpush1.xpose.msra.mxu0 0.0
    %313 = vmatprep.subr.mxu0 0.0
    %314 = vmatpush1.xpose.msra.mxu0 0.0
    %315 = vmatprep.subr.mxu0 0.0
    %316 = vmatpush1.xpose.msra.mxu0 0.0
    %317 = vmatprep.subr.mxu0 0.0
    %318 = vmatpush1.xpose.msra.mxu0 0.0
    %319 = vmatprep.subr.mxu0 0.0
    %320 = vmatpush1.xpose.msra.mxu0 0.0
    %321 = vmatprep.subr.mxu0 0.0
    %322 = vmatpush1.xpose.msra.mxu0 0.0
    %323 = vmatprep.subr.mxu0 0.0
    %324 = vmatpush1.xpose.msra.mxu0 0.0
    %325 = vmatprep.subr.mxu0 0.0
    %326 = vmatpush1.xpose.msra.mxu0 0.0
    %327 = vmatprep.subr.mxu0 0.0
    %328 = vmatpush1.xpose.msra.mxu0 0.0
    %329 = vmatprep.subr.mxu0 0.0
    %330 = vmatpush1.xpose.msra.mxu0 %v307
    %331 = vmatprep.subr.mxu0 0.0
    %332 = vmatpush1.xpose.msra.mxu0 %v305
    %333 = vmatprep.subr.mxu0 0.0
    %334 = vmatpush1.xpose.msra.mxu0 %v303
    %335 = vmatprep.subr.mxu0 0.0
    %336 = vmatpush1.xpose.msra.mxu0 %v300
    %337 = vmatprep.subr.mxu0 0.0
    %338 = vmatpush1.xpose.msra.mxu0 %v297
    %339 = vmatprep.subr.mxu0 0.0
    %340 = vmatpush1.xpose.msra.mxu0 %v294
    %341 = vmatprep.subr.mxu0 0.0
    %342 = vmatpush2.xpose.msra.mxu0 0.0
    %343 = vmatprep.subr.mxu0 0.0
    %344 = vmatpush2.xpose.msra.mxu0 0.0
    %345 = vmatprep.subr.mxu0 0.0
    %346 = vmatpush2.xpose.msra.mxu0 0.0
    %347 = vmatprep.subr.mxu0 0.0
    %348 = vmatpush2.xpose.msra.mxu0 0.0
    %349 = vmatprep.subr.mxu0 0.0
    %350 = vmatpush2.xpose.msra.mxu0 0.0
    %351 = vmatprep.subr.mxu0 0.0
    %352 = vmatpush2.xpose.msra.mxu0 0.0
    %353 = vmatprep.subr.mxu0 0.0
    %354 = vmatpush2.xpose.msra.mxu0 0.0
    %355 = vmatprep.subr.mxu0 0.0
    %356 = vmatpush2.xpose.msra.mxu0 0.0
    %357 = vmatprep.subr.mxu0 0.0
    %358 = vmatpush2.xpose.msra.mxu0 0.0
    %359 = vmatprep.subr.mxu0 0.0
    %360 = vmatpush2.xpose.msra.mxu0 0.0
    %361 = vmatprep.subr.mxu0 0.0
    %362 = vmatpush2.xpose.msra.mxu0 0.0
    %363 = vmatprep.subr.mxu0 0.0
    %364 = vmatpush2.xpose.msra.mxu0 0.0
    %365 = vmatprep.subr.mxu0 0.0
    %366 = vmatpush2.xpose.msra.mxu0 0.0
    %367 = vmatprep.subr.mxu0 0.0
    %368 = vmatpush2.xpose.msra.mxu0 0.0
    %369 = vmatprep.subr.mxu0 0.0
    %370 = vmatpush2.xpose.msra.mxu0 0.0
    %371 = vmatprep.subr.mxu0 0.0
    %372 = vmatpush2.xpose.msra.mxu0 0.0
    %373 = vmatprep.mubr.f32.mxu0 0.0
    %374 = vmatmul.mubr.f32.gmra.mxu0 %v246
    %v375 = vpop.f32.mrf.mxu0
    %v376 = vadd.f32 0.0, %v375
    %v377 = vpop.f32.mrf.mxu0
    %378 = vmatprep.mubr.f32.mxu0 0.0
    %379 = vmatmul.mubr.f32.gmra.mxu0 %v249
    %v380 = vpop.f32.mrf.mxu0
    %v381 = vadd.f32 0.0, %v380
    %v382 = vpop.f32.mrf.mxu0
    %383 = vmatprep.mubr.f32.mxu0 0.0
    %384 = vmatmul.mubr.f32.gmra.mxu0 %v252
    %v385 = vpop.f32.mrf.mxu0
    %v386 = vadd.f32 0.0, %v385
    %v387 = vpop.f32.mrf.mxu0
    %388 = vmatprep.mubr.f32.mxu0 0.0
    %389 = vmatmul.mubr.f32.gmra.mxu0 %v255
    %v390 = vpop.f32.mrf.mxu0
    %v391 = vadd.f32 0.0, %v390
    %v392 = vpop.f32.mrf.mxu0
    %393 = vmatprep.mubr.f32.mxu0 0.0
    %394 = vmatmul.mubr.f32.gmra.mxu0 %v258
    %v395 = vpop.f32.mrf.mxu0
    %v396 = vadd.f32 0.0, %v395
    %v397 = vpop.f32.mrf.mxu0
    %398 = vmatprep.mubr.f32.mxu0 0.0
    %399 = vmatmul.mubr.f32.gmra.mxu0 %v261
    %v400 = vpop.f32.mrf.mxu0
    %v401 = vadd.f32 0.0, %v400
    %v402 = vpop.f32.mrf.mxu0
    %403 = vmatprep.mubr.f32.mxu0 0.0
    %404 = vmatmul.mubr.f32.gmra.mxu0 %v264
    %v405 = vpop.f32.mrf.mxu0
    %v406 = vadd.f32 0.0, %v405
    %v407 = vpop.f32.mrf.mxu0
    %408 = vmatprep.mubr.f32.mxu0 0.0
    %409 = vmatmul.mubr.f32.gmra.mxu0 %v267
    %v410 = vpop.f32.mrf.mxu0
    %v411 = vadd.f32 0.0, %v410
    %v412 = vpop.f32.mrf.mxu0
    %413 = vmatprep.mubr.f32.mxu0 0.0
    %414 = vmatmul.mubr.f32.gmra.mxu0 %v270
    %v415 = vpop.f32.mrf.mxu0
    %v416 = vadd.f32 0.0, %v415
    %v417 = vpop.f32.mrf.mxu0
    %418 = vmatprep.mubr.f32.mxu0 0.0
    %419 = vmatmul.mubr.f32.gmra.mxu0 %v273
    %v420 = vpop.f32.mrf.mxu0
    %v421 = vadd.f32 0.0, %v420
    %v422 = vpop.f32.mrf.mxu0
    %423 = vmatprep.mubr.f32.mxu0 0.0
    %424 = vmatmul.mubr.f32.gmra.mxu0 %v276
    %v425 = vpop.f32.mrf.mxu0
    %v426 = vadd.f32 0.0, %v425
    %v427 = vpop.f32.mrf.mxu0
    %428 = vmatprep.mubr.f32.mxu0 0.0
    %429 = vmatmul.mubr.f32.gmra.mxu0 %v279
    %v430 = vpop.f32.mrf.mxu0
    %v431 = vadd.f32 0.0, %v430
    %v432 = vpop.f32.mrf.mxu0
    %433 = vmatprep.mubr.f32.mxu0 0.0
    %434 = vmatmul.mubr.f32.gmra.mxu0 %v282
    %v435 = vpop.f32.mrf.mxu0
    %v436 = vadd.f32 0.0, %v435
    %v437 = vpop.f32.mrf.mxu0
    %438 = vmatprep.mubr.f32.mxu0 0.0
    %439 = vmatmul.mubr.f32.gmra.mxu0 %v285
    %v440 = vpop.f32.mrf.mxu0
    %v441 = vadd.f32 0.0, %v440
    %v442 = vpop.f32.mrf.mxu0
    %443 = vmatprep.mubr.f32.mxu0 0.0
    %444 = vmatmul.mubr.f32.gmra.mxu0 %v288
    %v445 = vpop.f32.mrf.mxu0
    %v446 = vadd.f32 0.0, %v445
    %v447 = vpop.f32.mrf.mxu0
    %448 = vmatprep.mubr.f32.mxu0 0.0
    %449 = vmatmul.mubr.f32.gmra.mxu0 %v291
    %v450 = vpop.f32.mrf.mxu0
    %v451 = vadd.f32 0.0, %v450
    %v452 = vpop.f32.mrf.mxu0
    %453 = vdwg.mxu0
    %v454 = vld [vmem:[%s1] sm:$0xff]
    %v455 = vld [vmem:[%s1 + $0x8] sm:$0xff]
    %v456 = vld [vmem:[%s2] sm:$0x1]
    %v457 = vlaneseq
    %v458 = vshrl.u32 %v457, 7
    %v459 = vsub.s32 0, %v458
    %v460 = vrot.slane %v456, %v459
    %461 = vset.pattern.permute.xlu0 0
    %462 = vperm.xlu0 %461, %v454
    %v463 = vpop.permute.xlu0 %462
    %464 = vset.pattern.permute.xlu0 0
    %465 = vperm.xlu0 %464, %v455
    %v466 = vpop.permute.xlu0 %465
    %vm467 = vcmp.le.s32.totalorder %v460, %v463
    %vm468 = vcmp.le.s32.totalorder %v460, %v466
    %469 = vset.pattern.permute.xlu0 1
    %470 = vperm.xlu0 %469, %v454
    %v471 = vpop.permute.xlu0 %470
    %472 = vset.pattern.permute.xlu0 1
    %473 = vperm.xlu0 %472, %v455
    %v474 = vpop.permute.xlu0 %473
    %vm475 = vcmp.ge.s32.totalorder %v460, %v471
    %vm476 = vcmp.ge.s32.totalorder %v460, %v474
    %vm477 = vmand %vm467, %vm475
    %vm478 = vmand %vm468, %vm476
    %v479 = vsel %vm477, %v376, -1e+30
    %v480 = vsel %vm478, %v381, -1e+30
    %v481 = vsel %vm477, %v386, -1e+30
    %v482 = vsel %vm478, %v391, -1e+30
    %v483 = vsel %vm477, %v396, -1e+30
    %v484 = vsel %vm478, %v401, -1e+30
    %v485 = vsel %vm477, %v406, -1e+30
    %v486 = vsel %vm478, %v411, -1e+30
    %v487 = vsel %vm477, %v416, -1e+30
    %v488 = vsel %vm478, %v421, -1e+30
    %v489 = vsel %vm477, %v426, -1e+30
    %v490 = vsel %vm478, %v431, -1e+30
    %v491 = vsel %vm477, %v436, -1e+30
    %v492 = vsel %vm478, %v441, -1e+30
    %v493 = vsel %vm477, %v446, -1e+30
    %v494 = vsel %vm478, %v451, -1e+30
    %vm495 = vcmask 392192
    %v496 = vsel %vm495, %v479, -inf
    %497 = vmax.xlane.f32.xlu0 %v496
    %v498 = vpop.xlane.xlu0 %497
    %v499 = vsel %vm495, %v480, -inf
    %500 = vmax.xlane.f32.xlu0 %v499
    %v501 = vpop.xlane.xlu0 %500
    %v502 = vsel %vm495, %v481, -inf
    %503 = vmax.xlane.f32.xlu0 %v502
    %v504 = vpop.xlane.xlu0 %503
    %v505 = vsel %vm495, %v482, -inf
    %506 = vmax.xlane.f32.xlu0 %v505
    %v507 = vpop.xlane.xlu0 %506
    %v508 = vsel %vm495, %v483, -inf
    %509 = vmax.xlane.f32.xlu0 %v508
    %v510 = vpop.xlane.xlu0 %509
    %v511 = vsel %vm495, %v484, -inf
    %512 = vmax.xlane.f32.xlu0 %v511
    %v513 = vpop.xlane.xlu0 %512
    %v514 = vsel %vm495, %v485, -inf
    %515 = vmax.xlane.f32.xlu0 %v514
    %v516 = vpop.xlane.xlu0 %515
    %v517 = vsel %vm495, %v486, -inf
    %518 = vmax.xlane.f32.xlu0 %v517
    %v519 = vpop.xlane.xlu0 %518
    %v520 = vsel %vm495, %v487, -inf
    %521 = vmax.xlane.f32.xlu0 %v520
    %v522 = vpop.xlane.xlu0 %521
    %v523 = vsel %vm495, %v488, -inf
    %524 = vmax.xlane.f32.xlu0 %v523
    %v525 = vpop.xlane.xlu0 %524
    %v526 = vsel %vm495, %v489, -inf
    %527 = vmax.xlane.f32.xlu0 %v526
    %v528 = vpop.xlane.xlu0 %527
    %v529 = vsel %vm495, %v490, -inf
    %530 = vmax.xlane.f32.xlu0 %v529
    %v531 = vpop.xlane.xlu0 %530
    %v532 = vsel %vm495, %v491, -inf
    %533 = vmax.xlane.f32.xlu0 %v532
    %v534 = vpop.xlane.xlu0 %533
    %v535 = vsel %vm495, %v492, -inf
    %536 = vmax.xlane.f32.xlu0 %v535
    %v537 = vpop.xlane.xlu0 %536
    %v538 = vsel %vm495, %v493, -inf
    %539 = vmax.xlane.f32.xlu0 %v538
    %v540 = vpop.xlane.xlu0 %539
    %v541 = vsel %vm495, %v494, -inf
    %542 = vmax.xlane.f32.xlu0 %v541
    %v543 = vpop.xlane.xlu0 %542
    %v544 = vsub.f32 %v479, %v498
    %v545 = vsub.f32 %v480, %v501
    %v546 = vsub.f32 %v481, %v504
    %v547 = vsub.f32 %v482, %v507
    %v548 = vsub.f32 %v483, %v510
    %v549 = vsub.f32 %v484, %v513
    %v550 = vsub.f32 %v485, %v516
    %v551 = vsub.f32 %v486, %v519
    %v552 = vsub.f32 %v487, %v522
    %v553 = vsub.f32 %v488, %v525
    %v554 = vsub.f32 %v489, %v528
    %v555 = vsub.f32 %v490, %v531
    %v556 = vsub.f32 %v491, %v534
    %v557 = vsub.f32 %v492, %v537
    %v558 = vsub.f32 %v493, %v540
    %v559 = vsub.f32 %v494, %v543
    %v560 = vmul.f32 %v544, 1.442695
    %v561 = vpow.pop %v560
    %v562 = vmul.f32 %v545, 1.442695
    %v563 = vpow.pop %v562
    %v564 = vmul.f32 %v546, 1.442695
    %v565 = vpow.pop %v564
    %v566 = vmul.f32 %v547, 1.442695
    %v567 = vpow.pop %v566
    %v568 = vmul.f32 %v548, 1.442695
    %v569 = vpow.pop %v568
    %v570 = vmul.f32 %v549, 1.442695
    %v571 = vpow.pop %v570
    %v572 = vmul.f32 %v550, 1.442695
    %v573 = vpow.pop %v572
    %v574 = vmul.f32 %v551, 1.442695
    %v575 = vpow.pop %v574
    %v576 = vmul.f32 %v552, 1.442695
    %v577 = vpow.pop %v576
    %v578 = vmul.f32 %v553, 1.442695
    %v579 = vpow.pop %v578
    %v580 = vmul.f32 %v554, 1.442695
    %v581 = vpow.pop %v580
    %v582 = vmul.f32 %v555, 1.442695
    %v583 = vpow.pop %v582
    %v584 = vmul.f32 %v556, 1.442695
    %v585 = vpow.pop %v584
    %v586 = vmul.f32 %v557, 1.442695
    %v587 = vpow.pop %v586
    %v588 = vmul.f32 %v558, 1.442695
    %v589 = vpow.pop %v588
    %v590 = vmul.f32 %v559, 1.442695
    %v591 = vpow.pop %v590
    %v592 = vsel %vm495, %v561, 0.0
    %593 = vadd.xlane.f32.xlu0 %v592
    %v594 = vpop.xlane.xlu0 %593
    %v595 = vsel %vm495, %v563, 0.0
    %596 = vadd.xlane.f32.xlu0 %v595
    %v597 = vpop.xlane.xlu0 %596
    %v598 = vsel %vm495, %v565, 0.0
    %599 = vadd.xlane.f32.xlu0 %v598
    %v600 = vpop.xlane.xlu0 %599
    %v601 = vsel %vm495, %v567, 0.0
    %602 = vadd.xlane.f32.xlu0 %v601
    %v603 = vpop.xlane.xlu0 %602
    %v604 = vsel %vm495, %v569, 0.0
    %605 = vadd.xlane.f32.xlu0 %v604
    %v606 = vpop.xlane.xlu0 %605
    %v607 = vsel %vm495, %v571, 0.0
    %608 = vadd.xlane.f32.xlu0 %v607
    %v609 = vpop.xlane.xlu0 %608
    %v610 = vsel %vm495, %v573, 0.0
    %611 = vadd.xlane.f32.xlu0 %v610
    %v612 = vpop.xlane.xlu0 %611
    %v613 = vsel %vm495, %v575, 0.0
    %614 = vadd.xlane.f32.xlu0 %v613
    %v615 = vpop.xlane.xlu0 %614
    %v616 = vsel %vm495, %v577, 0.0
    %617 = vadd.xlane.f32.xlu0 %v616
    %v618 = vpop.xlane.xlu0 %617
    %v619 = vsel %vm495, %v579, 0.0
    %620 = vadd.xlane.f32.xlu0 %v619
    %v621 = vpop.xlane.xlu0 %620
    %v622 = vsel %vm495, %v581, 0.0
    %623 = vadd.xlane.f32.xlu0 %v622
    %v624 = vpop.xlane.xlu0 %623
    %v625 = vsel %vm495, %v583, 0.0
    %626 = vadd.xlane.f32.xlu0 %v625
    %v627 = vpop.xlane.xlu0 %626
    %v628 = vsel %vm495, %v585, 0.0
    %629 = vadd.xlane.f32.xlu0 %v628
    %v630 = vpop.xlane.xlu0 %629
    %v631 = vsel %vm495, %v587, 0.0
    %632 = vadd.xlane.f32.xlu0 %v631
    %v633 = vpop.xlane.xlu0 %632
    %v634 = vsel %vm495, %v589, 0.0
    %635 = vadd.xlane.f32.xlu0 %v634
    %v636 = vpop.xlane.xlu0 %635
    %v637 = vsel %vm495, %v591, 0.0
    %638 = vadd.xlane.f32.xlu0 %v637
    %v639 = vpop.xlane.xlu0 %638
    %v641 = vsel %vm495, %v561, 0
    %v644 = vsel %vm495, %v563, 0
    %v647 = vsel %vm495, %v565, 0
    %v650 = vsel %vm495, %v567, 0
    %v653 = vsel %vm495, %v569, 0
    %v656 = vsel %vm495, %v571, 0
    %v659 = vsel %vm495, %v573, 0
    %v662 = vsel %vm495, %v575, 0
    %v665 = vsel %vm495, %v577, 0
    %v668 = vsel %vm495, %v579, 0
    %v671 = vsel %vm495, %v581, 0
    %v674 = vsel %vm495, %v583, 0
    %v677 = vsel %vm495, %v585, 0
    %v680 = vsel %vm495, %v587, 0
    %v683 = vsel %vm495, %v589, 0
    %v686 = vsel %vm495, %v591, 0
    %688 = vmatprep.subr.mxu0 0.0
    %689 = vmatpush1.msra.mxu0 0.0
    %690 = vmatprep.subr.mxu0 0.0
    %691 = vmatpush1.msra.mxu0 0.0
    %692 = vmatprep.subr.mxu0 0.0
    %693 = vmatpush1.msra.mxu0 0.0
    %694 = vmatprep.subr.mxu0 0.0
    %695 = vmatpush1.msra.mxu0 0.0
    %696 = vmatprep.subr.mxu0 0.0
    %697 = vmatpush1.msra.mxu0 0.0
    %698 = vmatprep.subr.mxu0 0.0
    %699 = vmatpush1.msra.mxu0 0.0
    %700 = vmatprep.subr.mxu0 0.0
    %701 = vmatpush1.msra.mxu0 0.0
    %702 = vmatprep.subr.mxu0 0.0
    %703 = vmatpush1.msra.mxu0 0.0
    %704 = vmatprep.subr.mxu0 0.0
    %705 = vmatpush1.msra.mxu0 0.0
    %706 = vmatprep.subr.mxu0 0.0
    %707 = vmatpush1.msra.mxu0 0.0
    %708 = vmatprep.subr.mxu0 0.0
    %709 = vmatpush1.msra.mxu0 %v194
    %710 = vmatprep.subr.mxu0 0.0
    %711 = vmatpush1.msra.mxu0 %v192
    %712 = vmatprep.subr.mxu0 0.0
    %713 = vmatpush1.msra.mxu0 %v184
    %714 = vmatprep.subr.mxu0 0.0
    %715 = vmatpush1.msra.mxu0 %v183
    %716 = vmatprep.subr.mxu0 0.0
    %717 = vmatpush1.msra.mxu0 %v182
    %718 = vmatprep.subr.mxu0 0.0
    %719 = vmatpush1.msra.mxu0 %v181
    %720 = vmatprep.subr.mxu0 0.0
    %721 = vmatpush2.msra.mxu0 0.0
    %722 = vmatprep.subr.mxu0 0.0
    %723 = vmatpush2.msra.mxu0 0.0
    %724 = vmatprep.subr.mxu0 0.0
    %725 = vmatpush2.msra.mxu0 0.0
    %726 = vmatprep.subr.mxu0 0.0
    %727 = vmatpush2.msra.mxu0 0.0
    %728 = vmatprep.subr.mxu0 0.0
    %729 = vmatpush2.msra.mxu0 0.0
    %730 = vmatprep.subr.mxu0 0.0
    %731 = vmatpush2.msra.mxu0 0.0
    %732 = vmatprep.subr.mxu0 0.0
    %733 = vmatpush2.msra.mxu0 0.0
    %734 = vmatprep.subr.mxu0 0.0
    %735 = vmatpush2.msra.mxu0 0.0
    %736 = vmatprep.subr.mxu0 0.0
    %737 = vmatpush2.msra.mxu0 0.0
    %738 = vmatprep.subr.mxu0 0.0
    %739 = vmatpush2.msra.mxu0 0.0
    %740 = vmatprep.subr.mxu0 0.0
    %741 = vmatpush2.msra.mxu0 0.0
    %742 = vmatprep.subr.mxu0 0.0
    %743 = vmatpush2.msra.mxu0 0.0
    %744 = vmatprep.subr.mxu0 0.0
    %745 = vmatpush2.msra.mxu0 0.0
    %746 = vmatprep.subr.mxu0 0.0
    %747 = vmatpush2.msra.mxu0 0.0
    %748 = vmatprep.subr.mxu0 0.0
    %749 = vmatpush2.msra.mxu0 0.0
    %750 = vmatprep.subr.mxu0 0.0
    %751 = vmatpush2.msra.mxu0 0.0
    %752 = vmatprep.mubr.f32.mxu0 0.0
    %753 = vmatmul.mubr.f32.gmra.mxu0 %v641
    %v754 = vpop.f32.mrf.mxu0
    %v755 = vadd.f32 0.0, %v754
    %v756 = vpop.f32.mrf.mxu0
    %757 = vmatprep.mubr.f32.mxu0 0.0
    %758 = vmatmul.mubr.f32.gmra.mxu0 %v644
    %v759 = vpop.f32.mrf.mxu0
    %v760 = vadd.f32 0.0, %v759
    %v761 = vpop.f32.mrf.mxu0
    %762 = vmatprep.mubr.f32.mxu0 0.0
    %763 = vmatmul.mubr.f32.gmra.mxu0 %v647
    %v764 = vpop.f32.mrf.mxu0
    %v765 = vadd.f32 0.0, %v764
    %v766 = vpop.f32.mrf.mxu0
    %767 = vmatprep.mubr.f32.mxu0 0.0
    %768 = vmatmul.mubr.f32.gmra.mxu0 %v650
    %v769 = vpop.f32.mrf.mxu0
    %v770 = vadd.f32 0.0, %v769
    %v771 = vpop.f32.mrf.mxu0
    %772 = vmatprep.mubr.f32.mxu0 0.0
    %773 = vmatmul.mubr.f32.gmra.mxu0 %v653
    %v774 = vpop.f32.mrf.mxu0
    %v775 = vadd.f32 0.0, %v774
    %v776 = vpop.f32.mrf.mxu0
    %777 = vmatprep.mubr.f32.mxu0 0.0
    %778 = vmatmul.mubr.f32.gmra.mxu0 %v656
    %v779 = vpop.f32.mrf.mxu0
    %v780 = vadd.f32 0.0, %v779
    %v781 = vpop.f32.mrf.mxu0
    %782 = vmatprep.mubr.f32.mxu0 0.0
    %783 = vmatmul.mubr.f32.gmra.mxu0 %v659
    %v784 = vpop.f32.mrf.mxu0
    %v785 = vadd.f32 0.0, %v784
    %v786 = vpop.f32.mrf.mxu0
    %787 = vmatprep.mubr.f32.mxu0 0.0
    %788 = vmatmul.mubr.f32.gmra.mxu0 %v662
    %v789 = vpop.f32.mrf.mxu0
    %v790 = vadd.f32 0.0, %v789
    %v791 = vpop.f32.mrf.mxu0
    %792 = vmatprep.mubr.f32.mxu0 0.0
    %793 = vmatmul.mubr.f32.gmra.mxu0 %v665
    %v794 = vpop.f32.mrf.mxu0
    %v795 = vadd.f32 0.0, %v794
    %v796 = vpop.f32.mrf.mxu0
    %797 = vmatprep.mubr.f32.mxu0 0.0
    %798 = vmatmul.mubr.f32.gmra.mxu0 %v668
    %v799 = vpop.f32.mrf.mxu0
    %v800 = vadd.f32 0.0, %v799
    %v801 = vpop.f32.mrf.mxu0
    %802 = vmatprep.mubr.f32.mxu0 0.0
    %803 = vmatmul.mubr.f32.gmra.mxu0 %v671
    %v804 = vpop.f32.mrf.mxu0
    %v805 = vadd.f32 0.0, %v804
    %v806 = vpop.f32.mrf.mxu0
    %807 = vmatprep.mubr.f32.mxu0 0.0
    %808 = vmatmul.mubr.f32.gmra.mxu0 %v674
    %v809 = vpop.f32.mrf.mxu0
    %v810 = vadd.f32 0.0, %v809
    %v811 = vpop.f32.mrf.mxu0
    %812 = vmatprep.mubr.f32.mxu0 0.0
    %813 = vmatmul.mubr.f32.gmra.mxu0 %v677
    %v814 = vpop.f32.mrf.mxu0
    %v815 = vadd.f32 0.0, %v814
    %v816 = vpop.f32.mrf.mxu0
    %817 = vmatprep.mubr.f32.mxu0 0.0
    %818 = vmatmul.mubr.f32.gmra.mxu0 %v680
    %v819 = vpop.f32.mrf.mxu0
    %v820 = vadd.f32 0.0, %v819
    %v821 = vpop.f32.mrf.mxu0
    %822 = vmatprep.mubr.f32.mxu0 0.0
    %823 = vmatmul.mubr.f32.gmra.mxu0 %v683
    %v824 = vpop.f32.mrf.mxu0
    %v825 = vadd.f32 0.0, %v824
    %v826 = vpop.f32.mrf.mxu0
    %827 = vmatprep.mubr.f32.mxu0 0.0
    %828 = vmatmul.mubr.f32.gmra.mxu0 %v686
    %v829 = vpop.f32.mrf.mxu0
    %v830 = vadd.f32 0.0, %v829
    %v831 = vpop.f32.mrf.mxu0
    %832 = vdwg.mxu0
    %v833 = vrcp.pop %v594
    %v834 = vrcp.pop %v597
    %v835 = vrcp.pop %v600
    %v836 = vrcp.pop %v603
    %v837 = vrcp.pop %v606
    %v838 = vrcp.pop %v609
    %v839 = vrcp.pop %v612
    %v840 = vrcp.pop %v615
    %v841 = vrcp.pop %v618
    %v842 = vrcp.pop %v621
    %v843 = vrcp.pop %v624
    %v844 = vrcp.pop %v627
    %v845 = vrcp.pop %v630
    %v846 = vrcp.pop %v633
    %v847 = vrcp.pop %v636
    %v848 = vrcp.pop %v639
    %v849 = vmul.f32 %v755, %v833
    %v850 = vmul.f32 %v760, %v834
    %v851 = vmul.f32 %v765, %v835
    %v852 = vmul.f32 %v770, %v836
    %v853 = vmul.f32 %v775, %v837
    %v854 = vmul.f32 %v780, %v838
    %v855 = vmul.f32 %v785, %v839
    %v856 = vmul.f32 %v790, %v840
    %v857 = vmul.f32 %v795, %v841
    %v858 = vmul.f32 %v800, %v842
    %v859 = vmul.f32 %v805, %v843
    %v860 = vmul.f32 %v810, %v844
    %v861 = vmul.f32 %v815, %v845
    %v862 = vmul.f32 %v820, %v846
    %v863 = vmul.f32 %v825, %v847
    %v864 = vmul.f32 %v830, %v848
    %v865 = vmul.f32 %v849, %v200
    %v866 = vmul.f32 %v850, %v200
    %v867 = vmul.f32 %v851, %v206
    %v868 = vmul.f32 %v852, %v206
    %v869 = vadd.f32 %v865, %v867
    %v870 = vadd.f32 %v866, %v868
    %v871 = vmul.f32 %v853, %v212
    %v872 = vmul.f32 %v854, %v212
    %v873 = vadd.f32 %v869, %v871
    %v874 = vadd.f32 %v870, %v872
    %v875 = vmul.f32 %v855, %v218
    %v876 = vmul.f32 %v856, %v218
    %v877 = vadd.f32 %v873, %v875
    %v878 = vadd.f32 %v874, %v876
    %v879 = vmul.f32 %v857, %v224
    %v880 = vmul.f32 %v858, %v224
    %v881 = vadd.f32 %v877, %v879
    %v882 = vadd.f32 %v878, %v880
    %v883 = vmul.f32 %v859, %v230
    %v884 = vmul.f32 %v860, %v230
    %v885 = vadd.f32 %v881, %v883
    %v886 = vadd.f32 %v882, %v884
    %v887 = vmul.f32 %v861, %v236
    %v888 = vmul.f32 %v862, %v236
    %v889 = vadd.f32 %v885, %v887
    %v890 = vadd.f32 %v886, %v888
    %v891 = vmul.f32 %v863, %v242
    %v892 = vmul.f32 %v864, %v242
    %v893 = vadd.f32 %v889, %v891
    %v894 = vadd.f32 %v890, %v892
    %v895 = vlaneseq
    %v896 = vshrl.u32 %v895, 7
    %v897 = vsub.s32 4, %v896
    %v898 = vrot.slane %v39, %v897
    %903 = vrot.lane.b32.xlu0 %v83, 32
    %v904 = vpop.permute.xlu0 %903
    %905 = vrot.lane.b32.xlu0 %v84, 32
    %v906 = vpop.permute.xlu0 %905
    %907 = vrot.lane.b32.xlu0 %v85, 32
    %v908 = vpop.permute.xlu0 %907
    %909 = vrot.lane.b32.xlu0 %v86, 32
    %v910 = vpop.permute.xlu0 %909
    %v916 = vsel %vm43, %v893, 0
    %v919 = vsel %vm43, %v894, 0
    %921 = vmatprep.subr.mxu0 0.0
    %922 = vmatpush1.msra.mxu0 0.0
    %923 = vmatprep.subr.mxu0 0.0
    %924 = vmatpush1.msra.mxu0 0.0
    %925 = vmatprep.subr.mxu0 0.0
    %926 = vmatpush1.msra.mxu0 0.0
    %927 = vmatprep.subr.mxu0 0.0
    %928 = vmatpush1.msra.mxu0 0.0
    %929 = vmatprep.subr.mxu0 0.0
    %930 = vmatpush1.msra.mxu0 0.0
    %931 = vmatprep.subr.mxu0 0.0
    %932 = vmatpush1.msra.mxu0 0.0
    %933 = vmatprep.subr.mxu0 0.0
    %934 = vmatpush1.msra.mxu0 0.0
    %935 = vmatprep.subr.mxu0 0.0
    %936 = vmatpush1.msra.mxu0 0.0
    %937 = vmatprep.subr.mxu0 0.0
    %938 = vmatpush1.msra.mxu0 0.0
    %939 = vmatprep.subr.mxu0 0.0
    %940 = vmatpush1.msra.mxu0 0.0
    %941 = vmatprep.subr.mxu0 0.0
    %942 = vmatpush1.msra.mxu0 0.0
    %943 = vmatprep.subr.mxu0 0.0
    %944 = vmatpush1.msra.mxu0 0.0
    %945 = vmatprep.subr.mxu0 0.0
    %946 = vmatpush1.msra.mxu0 %v910
    %947 = vmatprep.subr.mxu0 0.0
    %948 = vmatpush1.msra.mxu0 %v908
    %949 = vmatprep.subr.mxu0 0.0
    %950 = vmatpush1.msra.mxu0 %v906
    %951 = vmatprep.subr.mxu0 0.0
    %952 = vmatpush1.msra.mxu0 %v904
    %953 = vmatprep.subr.mxu0 0.0
    %954 = vmatpush2.msra.mxu0 0.0
    %955 = vmatprep.subr.mxu0 0.0
    %956 = vmatpush2.msra.mxu0 0.0
    %957 = vmatprep.subr.mxu0 0.0
    %958 = vmatpush2.msra.mxu0 0.0
    %959 = vmatprep.subr.mxu0 0.0
    %960 = vmatpush2.msra.mxu0 0.0
    %961 = vmatprep.subr.mxu0 0.0
    %962 = vmatpush2.msra.mxu0 0.0
    %963 = vmatprep.subr.mxu0 0.0
    %964 = vmatpush2.msra.mxu0 0.0
    %965 = vmatprep.subr.mxu0 0.0
    %966 = vmatpush2.msra.mxu0 0.0
    %967 = vmatprep.subr.mxu0 0.0
    %968 = vmatpush2.msra.mxu0 0.0
    %969 = vmatprep.subr.mxu0 0.0
    %970 = vmatpush2.msra.mxu0 0.0
    %971 = vmatprep.subr.mxu0 0.0
    %972 = vmatpush2.msra.mxu0 0.0
    %973 = vmatprep.subr.mxu0 0.0
    %974 = vmatpush2.msra.mxu0 0.0
    %975 = vmatprep.subr.mxu0 0.0
    %976 = vmatpush2.msra.mxu0 0.0
    %977 = vmatprep.subr.mxu0 0.0
    %978 = vmatpush2.msra.mxu0 0.0
    %979 = vmatprep.subr.mxu0 0.0
    %980 = vmatpush2.msra.mxu0 0.0
    %981 = vmatprep.subr.mxu0 0.0
    %982 = vmatpush2.msra.mxu0 0.0
    %983 = vmatprep.subr.mxu0 0.0
    %984 = vmatpush2.msra.mxu0 0.0
    %985 = vmatprep.mubr.f32.mxu0 0.0
    %986 = vmatmul.mubr.f32.gmra.mxu0 %v916
    %v987 = vpop.f32.mrf.mxu0
    %v988 = vadd.f32 %v898, %v987
    %v989 = vpop.f32.mrf.mxu0
    %990 = vmatprep.mubr.f32.mxu0 0.0
    %991 = vmatmul.mubr.f32.gmra.mxu0 %v919
    %v992 = vpop.f32.mrf.mxu0
    %v993 = vadd.f32 %v898, %v992
    %v994 = vpop.f32.mrf.mxu0
    %995 = vdwg.mxu0
    %v996 = vsel %vm43, %v988, 0.0
    %997 = vadd.xlane.f32.xlu0 %v996
    %v998 = vpop.xlane.xlu0 %997
    %v999 = vsel %vm43, %v993, 0.0
    %1000 = vadd.xlane.f32.xlu0 %v999
    %v1001 = vpop.xlane.xlu0 %1000
    %v1002 = vmul.f32 %v998, %v50
    %v1003 = vmul.f32 %v1001, %v50
    %v1004 = vsub.f32 %v988, %v1002
    %v1005 = vsub.f32 %v993, %v1003
    %v1006 = vmul.f32 %v1004, %v1004
    %v1007 = vmul.f32 %v1005, %v1005
    %v1008 = vsel %vm43, %v1006, 0.0
    %1009 = vadd.xlane.f32.xlu0 %v1008
    %v1010 = vpop.xlane.xlu0 %1009
    %v1011 = vsel %vm43, %v1007, 0.0
    %1012 = vadd.xlane.f32.xlu0 %v1011
    %v1013 = vpop.xlane.xlu0 %1012
    %v1014 = vmul.f32 %v1010, %v50
    %v1015 = vmul.f32 %v1013, %v50
    %v1016 = vadd.f32 %v1014, 1e-05
    %v1017 = vadd.f32 %v1015, 1e-05
    %v1018 = vrsqrt.pop %v1016
    %v1019 = vrsqrt.pop %v1017
    %v1020 = vmul.f32 %v1004, %v1018
    %v1021 = vmul.f32 %v1005, %v1019
    %v1022 = vlaneseq
    %v1023 = vshrl.u32 %v1022, 7
    %v1024 = vsub.s32 2, %v1023
    %v1025 = vrot.slane %v39, %v1024
    %v1026 = vmul.f32 %v1020, %v1025
    %v1027 = vmul.f32 %v1021, %v1025
    %v1028 = vlaneseq
    %v1029 = vshrl.u32 %v1028, 7
    %v1030 = vsub.s32 3, %v1029
    %v1031 = vrot.slane %v39, %v1030
    %v1032 = vadd.f32 %v1026, %v1031
    %v1033 = vadd.f32 %v1027, %v1031
    %v1034 = vld [vmem:[%s7] sm:$0xff]
    %v1035 = vld [vmem:[%s7 + $0x8] sm:$0xff]
    %v1036 = vld [vmem:[%s7 + $0x10] sm:$0xff]
    %v1037 = vld [vmem:[%s7 + $0x18] sm:$0xff]
    %v1039 = vsel %vm43, %v1032, 0
    %v1042 = vsel %vm43, %v1033, 0
    %1044 = vmatprep.subr.mxu0 0.0
    %1045 = vmatpush1.msra.mxu0 0.0
    %1046 = vmatprep.subr.mxu0 0.0
    %1047 = vmatpush1.msra.mxu0 0.0
    %1048 = vmatprep.subr.mxu0 0.0
    %1049 = vmatpush1.msra.mxu0 0.0
    %1050 = vmatprep.subr.mxu0 0.0
    %1051 = vmatpush1.msra.mxu0 0.0
    %1052 = vmatprep.subr.mxu0 0.0
    %1053 = vmatpush1.msra.mxu0 0.0
    %1054 = vmatprep.subr.mxu0 0.0
    %1055 = vmatpush1.msra.mxu0 0.0
    %1056 = vmatprep.subr.mxu0 0.0
    %1057 = vmatpush1.msra.mxu0 0.0
    %1058 = vmatprep.subr.mxu0 0.0
    %1059 = vmatpush1.msra.mxu0 0.0
    %1060 = vmatprep.subr.mxu0 0.0
    %1061 = vmatpush1.msra.mxu0 0.0
    %1062 = vmatprep.subr.mxu0 0.0
    %1063 = vmatpush1.msra.mxu0 0.0
    %1064 = vmatprep.subr.mxu0 0.0
    %1065 = vmatpush1.msra.mxu0 0.0
    %1066 = vmatprep.subr.mxu0 0.0
    %1067 = vmatpush1.msra.mxu0 0.0
    %1068 = vmatprep.subr.mxu0 0.0
    %1069 = vmatpush1.msra.mxu0 %v1037
    %1070 = vmatprep.subr.mxu0 0.0
    %1071 = vmatpush1.msra.mxu0 %v1036
    %1072 = vmatprep.subr.mxu0 0.0
    %1073 = vmatpush1.msra.mxu0 %v1035
    %1074 = vmatprep.subr.mxu0 0.0
    %1075 = vmatpush1.msra.mxu0 %v1034
    %1076 = vmatprep.subr.mxu0 0.0
    %1077 = vmatpush2.msra.mxu0 0.0
    %1078 = vmatprep.subr.mxu0 0.0
    %1079 = vmatpush2.msra.mxu0 0.0
    %1080 = vmatprep.subr.mxu0 0.0
    %1081 = vmatpush2.msra.mxu0 0.0
    %1082 = vmatprep.subr.mxu0 0.0
    %1083 = vmatpush2.msra.mxu0 0.0
    %1084 = vmatprep.subr.mxu0 0.0
    %1085 = vmatpush2.msra.mxu0 0.0
    %1086 = vmatprep.subr.mxu0 0.0
    %1087 = vmatpush2.msra.mxu0 0.0
    %1088 = vmatprep.subr.mxu0 0.0
    %1089 = vmatpush2.msra.mxu0 0.0
    %1090 = vmatprep.subr.mxu0 0.0
    %1091 = vmatpush2.msra.mxu0 0.0
    %1092 = vmatprep.subr.mxu0 0.0
    %1093 = vmatpush2.msra.mxu0 0.0
    %1094 = vmatprep.subr.mxu0 0.0
    %1095 = vmatpush2.msra.mxu0 0.0
    %1096 = vmatprep.subr.mxu0 0.0
    %1097 = vmatpush2.msra.mxu0 0.0
    %1098 = vmatprep.subr.mxu0 0.0
    %1099 = vmatpush2.msra.mxu0 0.0
    %1100 = vmatprep.subr.mxu0 0.0
    %1101 = vmatpush2.msra.mxu0 0.0
    %1102 = vmatprep.subr.mxu0 0.0
    %1103 = vmatpush2.msra.mxu0 0.0
    %1104 = vmatprep.subr.mxu0 0.0
    %1105 = vmatpush2.msra.mxu0 0.0
    %1106 = vmatprep.subr.mxu0 0.0
    %1107 = vmatpush2.msra.mxu0 0.0
    %1108 = vmatprep.mubr.f32.mxu0 0.0
    %1109 = vmatmul.mubr.f32.gmra.mxu0 %v1039
    %v1110 = vpop.f32.mrf.mxu0
    %v1111 = vadd.f32 0.0, %v1110
    %v1112 = vpop.f32.mrf.mxu0
    %1113 = vmatprep.mubr.f32.mxu0 0.0
    %1114 = vmatmul.mubr.f32.gmra.mxu0 %v1042
    %v1115 = vpop.f32.mrf.mxu0
    %v1116 = vadd.f32 0.0, %v1115
    %v1117 = vpop.f32.mrf.mxu0
    %1118 = vdwg.mxu0
    %v1119 = vmax.f32 %v1111, 0.0
    %v1120 = vmax.f32 %v1116, 0.0
    %v1121 = vld [vmem:[%s8] sm:$0xff]
    %v1122 = vld [vmem:[%s8 + $0x8] sm:$0xff]
    %v1123 = vld [vmem:[%s8 + $0x10] sm:$0xff]
    %v1124 = vld [vmem:[%s8 + $0x18] sm:$0xff]
    %v1125 = vld [vmem:[%s8 + $0x20] sm:$0xff]
    %v1126 = vld [vmem:[%s8 + $0x28] sm:$0xff]
    %v1127 = vld [vmem:[%s8 + $0x30] sm:$0xff]
    %v1128 = vld [vmem:[%s8 + $0x38] sm:$0xff]
    %v1129 = vld [vmem:[%s8 + $0x40] sm:$0xff]
    %v1130 = vld [vmem:[%s8 + $0x48] sm:$0xff]
    %v1131 = vld [vmem:[%s8 + $0x50] sm:$0xff]
    %v1132 = vld [vmem:[%s8 + $0x58] sm:$0xff]
    %v1133 = vld [vmem:[%s8 + $0x60] sm:$0xff]
    %v1134 = vld [vmem:[%s8 + $0x68] sm:$0xff]
    %v1135 = vld [vmem:[%s8 + $0x70] sm:$0xff]
    %v1136 = vld [vmem:[%s8 + $0x78] sm:$0xff]
    %v1137 = vlaneseq
    %v1138 = vshrl.u32 %v1137, 7
    %v1139 = vsub.s32 5, %v1138
    %v1140 = vrot.slane %v39, %v1139
    %1141 = vmatprep.subr.mxu0 0.0
    %1142 = vmatpush1.msra.mxu0 %v1136
    %1143 = vmatprep.subr.mxu0 0.0
    %1144 = vmatpush1.msra.mxu0 %v1135
    %1145 = vmatprep.subr.mxu0 0.0
    %1146 = vmatpush1.msra.mxu0 %v1134
    %1147 = vmatprep.subr.mxu0 0.0
    %1148 = vmatpush1.msra.mxu0 %v1133
    %1149 = vmatprep.subr.mxu0 0.0
    %1150 = vmatpush1.msra.mxu0 %v1132
    %1151 = vmatprep.subr.mxu0 0.0
    %1152 = vmatpush1.msra.mxu0 %v1131
    %1153 = vmatprep.subr.mxu0 0.0
    %1154 = vmatpush1.msra.mxu0 %v1130
    %1155 = vmatprep.subr.mxu0 0.0
    %1156 = vmatpush1.msra.mxu0 %v1129
    %1157 = vmatprep.subr.mxu0 0.0
    %1158 = vmatpush1.msra.mxu0 %v1128
    %1159 = vmatprep.subr.mxu0 0.0
    %1160 = vmatpush1.msra.mxu0 %v1127
    %1161 = vmatprep.subr.mxu0 0.0
    %1162 = vmatpush1.msra.mxu0 %v1126
    %1163 = vmatprep.subr.mxu0 0.0
    %1164 = vmatpush1.msra.mxu0 %v1125
    %1165 = vmatprep.subr.mxu0 0.0
    %1166 = vmatpush1.msra.mxu0 %v1124
    %1167 = vmatprep.subr.mxu0 0.0
    %1168 = vmatpush1.msra.mxu0 %v1123
    %1169 = vmatprep.subr.mxu0 0.0
    %1170 = vmatpush1.msra.mxu0 %v1122
    %1171 = vmatprep.subr.mxu0 0.0
    %1172 = vmatpush1.msra.mxu0 %v1121
    %1173 = vmatprep.subr.mxu0 0.0
    %1174 = vmatpush2.msra.mxu0 0.0
    %1175 = vmatprep.subr.mxu0 0.0
    %1176 = vmatpush2.msra.mxu0 0.0
    %1177 = vmatprep.subr.mxu0 0.0
    %1178 = vmatpush2.msra.mxu0 0.0
    %1179 = vmatprep.subr.mxu0 0.0
    %1180 = vmatpush2.msra.mxu0 0.0
    %1181 = vmatprep.subr.mxu0 0.0
    %1182 = vmatpush2.msra.mxu0 0.0
    %1183 = vmatprep.subr.mxu0 0.0
    %1184 = vmatpush2.msra.mxu0 0.0
    %1185 = vmatprep.subr.mxu0 0.0
    %1186 = vmatpush2.msra.mxu0 0.0
    %1187 = vmatprep.subr.mxu0 0.0
    %1188 = vmatpush2.msra.mxu0 0.0
    %1189 = vmatprep.subr.mxu0 0.0
    %1190 = vmatpush2.msra.mxu0 0.0
    %1191 = vmatprep.subr.mxu0 0.0
    %1192 = vmatpush2.msra.mxu0 0.0
    %1193 = vmatprep.subr.mxu0 0.0
    %1194 = vmatpush2.msra.mxu0 0.0
    %1195 = vmatprep.subr.mxu0 0.0
    %1196 = vmatpush2.msra.mxu0 0.0
    %1197 = vmatprep.subr.mxu0 0.0
    %1198 = vmatpush2.msra.mxu0 0.0
    %1199 = vmatprep.subr.mxu0 0.0
    %1200 = vmatpush2.msra.mxu0 0.0
    %1201 = vmatprep.subr.mxu0 0.0
    %1202 = vmatpush2.msra.mxu0 0.0
    %1203 = vmatprep.subr.mxu0 0.0
    %1204 = vmatpush2.msra.mxu0 0.0
    %1205 = vmatprep.mubr.f32.mxu0 0.0
    %1206 = vmatmul.mubr.f32.gmra.mxu0 %v1119
    %v1207 = vpop.f32.mrf.mxu0
    %v1208 = vadd.f32 %v1140, %v1207
    %v1209 = vpop.f32.mrf.mxu0
    %1210 = vmatprep.mubr.f32.mxu0 0.0
    %1211 = vmatmul.mubr.f32.gmra.mxu0 %v1120
    %v1212 = vpop.f32.mrf.mxu0
    %v1213 = vadd.f32 %v1140, %v1212
    %v1214 = vpop.f32.mrf.mxu0
    %1215 = vdwg.mxu0
    %v1216 = vadd.f32 %v1208, %v988
    %v1217 = vadd.f32 %v1213, %v993
    %1218 = vst.msk [vmem:[#allocation2] sm:$0xff] %vm43, %v1216
    %1219 = vst.msk [vmem:[#allocation2 + $0x8] sm:$0xff] %vm43, %v1217
    %1220 = vst.msk [vmem:[%s11] sm:$0xff] %vm43, %v178
    %1221 = vst.msk [vmem:[%s12] sm:$0xff] %vm43, %v182
    %1223 = vst.msk [vmem:[%s11 + $0x8] sm:$0xff] %vm43, %v188
    %1224 = vst.msk [vmem:[%s12 + $0x8] sm:$0xff] %vm43, %v192
    %1225 = vst.msk [vmem:[%s11 + $0x10] sm:$0xff] %vm43, %v180
    %1226 = vst.msk [vmem:[%s12 + $0x10] sm:$0xff] %vm43, %v184
    %1228 = vst.msk [vmem:[%s11 + $0x18] sm:$0xff] %vm43, %v190
    %1229 = vst.msk [vmem:[%s12 + $0x18] sm:$0xff] %vm43, %v194
    // Predicated region
    $region42: #{residual_recurrent_block.1} parent=1 // pred_check
      _
    $region43: #{residual_recurrent_block.1} parent=1 // pred_check_branch
      %1231 = sbr.rel (0) target = $region45
    $region44: #{residual_recurrent_block.1} parent=1 // pred_region
      %s1233 = ssub.s32 256, 256
      %1234 = vsyncadd [#allocation3], %s1233
      %s1235 = sshll.u32 [#allocation2], 4
      %s1236 = int_to_ptr.vmem [resolvable:$true] %s1235
      %1241 = dma.vmem_to_hbm [thread:$0]  %s1236, 256, %s10, [#allocation3], 128, 128, 8
    $region45: #{residual_recurrent_block.1} parent=1 // pred_fallthru
      _
    // Predicated region
    $region46: #{residual_recurrent_block.1} parent=1 // pred_check
      _
    $region47: #{residual_recurrent_block.1} parent=1 // pred_check_branch
      %1243 = sbr.rel (0) target = $region49
    $region48: #{residual_recurrent_block.1} parent=1 // pred_region
      _
    $region49: #{residual_recurrent_block.1} parent=1 // pred_fallthru
      _
    // Predicated region
    $region50: #{residual_recurrent_block.1} parent=1 // pred_check
      _
    $region51: #{residual_recurrent_block.1} parent=1 // pred_check_branch
      %1245 = sbr.rel (0) target = $region53
    $region52: #{residual_recurrent_block.1} parent=1 // pred_region
      _
    $region53: #{residual_recurrent_block.1} parent=1 // pred_fallthru
      _
    // Predicated region
    $region54: #{residual_recurrent_block.1} parent=1 // pred_check
      _
    $region55: #{residual_recurrent_block.1} parent=1 // pred_check_branch
      %1247 = sbr.rel (0) target = $region57
    $region56: #{residual_recurrent_block.1} parent=1 // pred_region
      %1248 = dma.done [#allocation3], 256
    $region57: #{residual_recurrent_block.1} parent=1 // pred_fallthru
      _
    // Predicated region
    $region58: #{residual_recurrent_block.1} parent=1 // pred_check
      _
    $region59: #{residual_recurrent_block.1} parent=1 // pred_check_branch
      %1250 = sbr.rel (0) target = $region61
    $region60: #{residual_recurrent_block.1} parent=1 // pred_region
      _
    $region61: #{residual_recurrent_block.1} parent=1 // pred_fallthru
      _
    // Predicated region
    $region62: #{residual_recurrent_block.1} parent=1 // pred_check
      _
    $region63: #{residual_recurrent_block.1} parent=1 // pred_check_branch
      %1252 = sbr.rel (0) target = $region65
    $region64: #{residual_recurrent_block.1} parent=1 // pred_region
      _
    $region65: #{residual_recurrent_block.1} parent=1 // pred_fallthru
      _
    %1253 = vsyncpa [#allocation3], 1

</llo_original>
